<compile_context>
chip_gen: v6e
topology: v6e:2x2x1
jax: 0.10.0
libtpu: 0.0.40
codegen_flags: <defaults>
</compile_context>

<pallas_src>
import functools

import jax
import jax.numpy as jnp
from jax.experimental import pallas as pl
from jax.experimental.pallas import tpu as pltpu


def _pick_row_tile(h_out):
    """Largest row tile in {32,16,8} dividing H_out, else whole image per step."""
    for th in (32, 16, 8):
        if h_out % th == 0:
            return th
    return h_out


def _conv_im2col_kernel(x_ref, w_ref, b_ref, o_ref, *, kh, kw):
    """One grid step = one (image n, block of TH output rows).

    x_ref : (1, Hp, Wp, C)        bf16  whole padded image, resident across row blocks
    w_ref : (kh*kw*C, O_pad)      bf16  gated, flattened conv weights (tap-major)
    b_ref : (1, O_pad)            f32   gated bias
    o_ref : (1, TH, W_out, O_pad) f32   output row block
    """
    th = o_ref.shape[1]
    w_out = o_ref.shape[2]
    o_pad = o_ref.shape[3]
    c = x_ref.shape[3]
    m = th * w_out

    y = pl.program_id(1)
    row0 = y * th                       # first padded input row of this block's halo

    # Build the im2col tile (M, kh*kw*C): kh full-width row slabs are loaded once per
    # step; the kw column taps are static window slices of those slabs, flattened and
    # concatenated along the lane (contraction) axis.  This folds all kh*kw taps into
    # a single MXU contraction instead of kh*kw tiny serialized dots.
    cols = []
    for i in range(kh):                                     # static unroll: kernel rows
        slab = x_ref[0, pl.ds(row0 + i, th), :, :]          # (TH, Wp, C) bf16
        for j in range(kw):                                 # static unroll: kernel cols
            win = slab[:, j:j + w_out, :]                   # (TH, W_out, C)
            cols.append(win.reshape(m, c))                  # layout-preserving collapse
    patch = jnp.concatenate(cols, axis=-1)                  # (M, kh*kw*C) bf16

    # Single MXU dot per step, f32 accumulation; bias (gate already folded in).
    out = jnp.dot(patch, w_ref[...], preferred_element_type=jnp.float32)
    out = out + b_ref[...]                                  # (M, O_pad) + (1, O_pad)

    o_ref[0] = out.reshape(th, w_out, o_pad).astype(o_ref.dtype)


def prunable_conv2d_forward(x, weight, bias, include_flags, *, padding=1):
    """(conv2d(x) + bias) * include_flags, NCHW in/out (stride 1, groups 1)."""
    N, C, H, W = x.shape
    O, C_w, kh, kw = weight.shape
    assert C_w == C, "groups != 1 not supported"
    Hp, Wp = H + 2 * padding, W + 2 * padding
    H_out, W_out = Hp - kh + 1, Wp - kw + 1                 # stride-1 output size
    TH = _pick_row_tile(H_out)
    n_row_blocks = H_out // TH
    O_pad = pl.cdiv(O, 128) * 128                           # lane-dense output channels
    K_tot = kh * kw * C

    f = include_flags.astype(jnp.float32)
    # Fold the per-output-channel gate into weight and bias (exact for 0/1 gates).
    w_gated = weight.astype(jnp.float32) * f[:, None, None, None]
    b = bias.astype(jnp.float32) if bias is not None else jnp.zeros((O,), jnp.float32)
    b_gated = b * f

    # (O, C, kh, kw) -> (kh, kw, C, O) -> (kh*kw*C, O_pad), bf16 for the MXU.
    # Row index (i*kw + j)*C + c matches the in-kernel concat order.
    w_flat = jnp.transpose(w_gated, (2, 3, 1, 0)).reshape(K_tot, O)
    w_flat = jnp.pad(w_flat, ((0, 0), (0, O_pad - O))).astype(jnp.bfloat16)
    b_row = jnp.pad(b_gated, (0, O_pad - O)).reshape(1, O_pad)

    # NCHW -> NHWC (channels on the lane axis), zero-pad spatially, store bf16 in HBM
    # so the (single) input DMA moves half the bytes.
    x_pad = jnp.transpose(x, (0, 2, 3, 1))
    x_pad = jnp.pad(x_pad, ((0, 0), (padding, padding), (padding, padding), (0, 0)))
    x_pad = x_pad.astype(jnp.bfloat16)

    out_pad = pl.pallas_call(
        functools.partial(_conv_im2col_kernel, kh=kh, kw=kw),
        out_shape=jax.ShapeDtypeStruct((N, H_out, W_out, O_pad), jnp.float32),
        grid_spec=pl.GridSpec(
            grid=(N, n_row_blocks),
            in_specs=[
                # Whole padded image; constant block index along the row-block axis
                # -> fetched once per image, stays resident in VMEM (refetch 1.0x).
                pl.BlockSpec((1, Hp, Wp, C), lambda n, y: (n, 0, 0, 0)),
                # Grid-constant weight / bias blocks: single-buffered (no wasted VMEM).
                pl.BlockSpec((K_tot, O_pad), lambda n, y: (0, 0),
                             pipeline_mode=pl.Buffered(1)),
                pl.BlockSpec((1, O_pad), lambda n, y: (0, 0),
                             pipeline_mode=pl.Buffered(1)),
            ],
            out_specs=pl.BlockSpec((1, TH, W_out, O_pad), lambda n, y: (n, y, 0, 0)),
        ),
        compiler_params=pltpu.CompilerParams(
            dimension_semantics=("parallel", "parallel"),   # megacore sharding on v7x
            # Safe on all generations (v7x has 64 MiB physical); re-tune TH and this
            # limit per generation for large real layers.
            vmem_limit_bytes=48 * 1024 * 1024,
        ),
    )(x_pad, w_flat, b_row)

    # Drop channel padding + NHWC -> NCHW in one fused expression (module contract is
    # NCHW; if the surrounding model consumes NHWC, return out_pad[..., :O] directly).
    return jnp.transpose(out_pad[..., :O], (0, 3, 1, 2))


if __name__ == "__main__":
    key = jax.random.PRNGKey(0)
    k_x, k_w, k_b = jax.random.split(key, 3)

    # Small shapes consistent with the module: Conv2d(4 -> 8, k=3, pad=1), batch 2.
    N, C_in, H, W = 2, 4, 16, 16
    C_out, kh, kw = 8, 3, 3

    x = jax.random.normal(k_x, (N, C_in, H, W), dtype=jnp.float32)
    weight = jax.random.normal(k_w, (C_out, C_in, kh, kw), dtype=jnp.float32) * 0.1
    bias = jax.random.normal(k_b, (C_out,), dtype=jnp.float32) * 0.1
    # include_flags start at ones (as in __init__); zero two channels to exercise the gate.
    include_flags = jnp.ones((C_out,), dtype=jnp.float32).at[2].set(0.0).at[5].set(0.0)

    fwd = jax.jit(prunable_conv2d_forward, static_argnames=("padding",))
    out = jax.block_until_ready(fwd(x, weight, bias, include_flags, padding=1))

    # Reference: XLA conv in f32 (same semantics as torch Conv2d, NCHW).
    ref = jax.lax.conv_general_dilated(
        x, weight, window_strides=(1, 1), padding=((1, 1), (1, 1)),
        dimension_numbers=("NCHW", "OIHW", "NCHW"))
    ref = (ref + bias[None, :, None, None]) * include_flags[None, :, None, None]

    assert out.shape == (N, C_out, H, W)
    # bf16 matmul operands with f32 accumulation -> slightly looser tolerance.
    assert jnp.allclose(out, ref, atol=2e-2, rtol=2e-2)

    print("KERNEL_OK")
</pallas_src>

<mosaic_0001>
module attributes {stable_mosaic.version = 11 : i64} {
  func.func @_conv_im2col_kernel(%arg0: i32, %arg1: i32, %arg2: memref<1x18x18x4xbf16, #tpu.memory_space<vmem>>, %arg3: memref<36x128xbf16, #tpu.memory_space<vmem>>, %arg4: memref<1x128xf32, #tpu.memory_space<vmem>>, %arg5: memref<1x16x16x128xf32, #tpu.memory_space<vmem>>) attributes {dimension_semantics = [#tpu.dimension_semantics<parallel>, #tpu.dimension_semantics<parallel>], iteration_bounds = array<i64: 2, 1>, scalar_prefetch = 0 : i64, scratch_operands = 0 : i64, tpu.core_type = #tpu.core_type<tc>, window_params = [{transform_indices = @transform_0, window_bounds = array<i64: 1, 18, 18, 4>}, {pipeline_mode = #tpu.pipeline_mode<synchronous>, transform_indices = @transform_1, window_bounds = array<i64: 36, 128>}, {pipeline_mode = #tpu.pipeline_mode<synchronous>, transform_indices = @transform_2, window_bounds = array<i64: 1, 128>}, {transform_indices = @transform_3, window_bounds = array<i64: 1, 16, 16, 128>}]} {
    %c16_i32 = arith.constant 16 : i32
    %0 = arith.muli %arg1, %c16_i32 : i32
    %c0_i32 = arith.constant 0 : i32
    %1 = arith.addi %0, %c0_i32 : i32
    %c0 = arith.constant 0 : index
    %2 = arith.index_cast %1 : i32 to index
    %c0_0 = arith.constant 0 : index
    %c0_1 = arith.constant 0 : index
    %3 = vector.load %arg2[%c0, %2, %c0_0, %c0_1] : memref<1x18x18x4xbf16, #tpu.memory_space<vmem>>, vector<1x16x18x4xbf16>
    %4 = vector.shape_cast %3 : vector<1x16x18x4xbf16> to vector<16x18x4xbf16>
    %5 = vector.extract_strided_slice %4 {offsets = [0, 0, 0], sizes = [16, 16, 4], strides = [1, 1, 1]} : vector<16x18x4xbf16> to vector<16x16x4xbf16>
    %6 = vector.shape_cast %5 : vector<16x16x4xbf16> to vector<256x4xbf16>
    %7 = vector.extract_strided_slice %4 {offsets = [0, 1, 0], sizes = [16, 16, 4], strides = [1, 1, 1]} : vector<16x18x4xbf16> to vector<16x16x4xbf16>
    %8 = vector.shape_cast %7 : vector<16x16x4xbf16> to vector<256x4xbf16>
    %9 = vector.extract_strided_slice %4 {offsets = [0, 2, 0], sizes = [16, 16, 4], strides = [1, 1, 1]} : vector<16x18x4xbf16> to vector<16x16x4xbf16>
    %10 = vector.shape_cast %9 : vector<16x16x4xbf16> to vector<256x4xbf16>
    %c1_i32 = arith.constant 1 : i32
    %11 = arith.addi %0, %c1_i32 : i32
    %c0_2 = arith.constant 0 : index
    %12 = arith.index_cast %11 : i32 to index
    %c0_3 = arith.constant 0 : index
    %c0_4 = arith.constant 0 : index
    %13 = vector.load %arg2[%c0_2, %12, %c0_3, %c0_4] : memref<1x18x18x4xbf16, #tpu.memory_space<vmem>>, vector<1x16x18x4xbf16>
    %14 = vector.shape_cast %13 : vector<1x16x18x4xbf16> to vector<16x18x4xbf16>
    %15 = vector.extract_strided_slice %14 {offsets = [0, 0, 0], sizes = [16, 16, 4], strides = [1, 1, 1]} : vector<16x18x4xbf16> to vector<16x16x4xbf16>
    %16 = vector.shape_cast %15 : vector<16x16x4xbf16> to vector<256x4xbf16>
    %17 = vector.extract_strided_slice %14 {offsets = [0, 1, 0], sizes = [16, 16, 4], strides = [1, 1, 1]} : vector<16x18x4xbf16> to vector<16x16x4xbf16>
    %18 = vector.shape_cast %17 : vector<16x16x4xbf16> to vector<256x4xbf16>
    %19 = vector.extract_strided_slice %14 {offsets = [0, 2, 0], sizes = [16, 16, 4], strides = [1, 1, 1]} : vector<16x18x4xbf16> to vector<16x16x4xbf16>
    %20 = vector.shape_cast %19 : vector<16x16x4xbf16> to vector<256x4xbf16>
    %c2_i32 = arith.constant 2 : i32
    %21 = arith.addi %0, %c2_i32 : i32
    %c0_5 = arith.constant 0 : index
    %22 = arith.index_cast %21 : i32 to index
    %c0_6 = arith.constant 0 : index
    %c0_7 = arith.constant 0 : index
    %23 = vector.load %arg2[%c0_5, %22, %c0_6, %c0_7] : memref<1x18x18x4xbf16, #tpu.memory_space<vmem>>, vector<1x16x18x4xbf16>
    %24 = vector.shape_cast %23 : vector<1x16x18x4xbf16> to vector<16x18x4xbf16>
    %25 = vector.extract_strided_slice %24 {offsets = [0, 0, 0], sizes = [16, 16, 4], strides = [1, 1, 1]} : vector<16x18x4xbf16> to vector<16x16x4xbf16>
    %26 = vector.shape_cast %25 : vector<16x16x4xbf16> to vector<256x4xbf16>
    %27 = vector.extract_strided_slice %24 {offsets = [0, 1, 0], sizes = [16, 16, 4], strides = [1, 1, 1]} : vector<16x18x4xbf16> to vector<16x16x4xbf16>
    %28 = vector.shape_cast %27 : vector<16x16x4xbf16> to vector<256x4xbf16>
    %29 = vector.extract_strided_slice %24 {offsets = [0, 2, 0], sizes = [16, 16, 4], strides = [1, 1, 1]} : vector<16x18x4xbf16> to vector<16x16x4xbf16>
    %30 = vector.shape_cast %29 : vector<16x16x4xbf16> to vector<256x4xbf16>
    %31 = tpu.concatenate %6, %8, %10, %16, %18, %20, %26, %28, %30 in 1 : vector<256x4xbf16>, vector<256x4xbf16>, vector<256x4xbf16>, vector<256x4xbf16>, vector<256x4xbf16>, vector<256x4xbf16>, vector<256x4xbf16>, vector<256x4xbf16>, vector<256x4xbf16> -> vector<256x36xbf16>
    %c0_8 = arith.constant 0 : index
    %c0_9 = arith.constant 0 : index
    %32 = vector.load %arg3[%c0_8, %c0_9] : memref<36x128xbf16, #tpu.memory_space<vmem>>, vector<36x128xbf16>
    %cst = arith.constant dense<0.000000e+00> : vector<256x128xf32>
    %33 = tpu.matmul %31, %32, %cst {dimension_numbers = #tpu.dot_dimension_numbers<[1], [0], [0], [1], [0, 0, 1, 1], [], []>} : vector<256x36xbf16>, vector<36x128xbf16>, vector<256x128xf32> -> vector<256x128xf32>
    %c0_10 = arith.constant 0 : index
    %c0_11 = arith.constant 0 : index
    %34 = vector.load %arg4[%c0_10, %c0_11] : memref<1x128xf32, #tpu.memory_space<vmem>>, vector<1x128xf32>
    %35 = vector.broadcast %34 : vector<1x128xf32> to vector<256x128xf32>
    %36 = arith.addf %33, %35 : vector<256x128xf32>
    %37 = vector.shape_cast %36 : vector<256x128xf32> to vector<16x16x128xf32>
    %c0_12 = arith.constant 0 : index
    %c0_13 = arith.constant 0 : index
    %c0_14 = arith.constant 0 : index
    %c0_15 = arith.constant 0 : index
    %38 = vector.load %arg5[%c0_12, %c0_13, %c0_14, %c0_15] : memref<1x16x16x128xf32, #tpu.memory_space<vmem>>, vector<1x16x16x128xf32>
    %39 = vector.shape_cast %38 : vector<1x16x16x128xf32> to vector<16x16x128xf32>
    %40 = vector.shape_cast %37 : vector<16x16x128xf32> to vector<1x16x16x128xf32>
    tpu.vector_store %arg5[%c0_12, %c0_13, %c0_14, %c0_15], %40 {strides = array<i32>} : memref<1x16x16x128xf32, #tpu.memory_space<vmem>>, vector<1x16x16x128xf32>,
    return
  }
  func.func @transform_0(%arg0: i32, %arg1: i32) -> (i32, i32, i32, i32) {
    %c0_i32 = arith.constant 0 : i32
    %c0_i32_0 = arith.constant 0 : i32
    %c0_i32_1 = arith.constant 0 : i32
    %c0_i32_2 = arith.constant 0 : i32
    return %arg0, %c0_i32, %c0_i32_0, %c0_i32_1 : i32, i32, i32, i32
  }
  func.func @transform_1(%arg0: i32, %arg1: i32) -> (i32, i32) {
    %c0_i32 = arith.constant 0 : i32
    %c0_i32_0 = arith.constant 0 : i32
    %c0_i32_1 = arith.constant 0 : i32
    return %c0_i32, %c0_i32_0 : i32, i32
  }
  func.func @transform_2(%arg0: i32, %arg1: i32) -> (i32, i32) {
    %c0_i32 = arith.constant 0 : i32
    %c0_i32_0 = arith.constant 0 : i32
    %c0_i32_1 = arith.constant 0 : i32
    return %c0_i32, %c0_i32_0 : i32, i32
  }
  func.func @transform_3(%arg0: i32, %arg1: i32) -> (i32, i32, i32, i32) {
    %c0_i32 = arith.constant 0 : i32
    %c0_i32_0 = arith.constant 0 : i32
    %c0_i32_1 = arith.constant 0 : i32
    return %arg0, %arg1, %c0_i32, %c0_i32_0 : i32, i32, i32, i32
  }
}

</mosaic_0001>

<llo_original>
// kernel: mul.9
$region0: #{mul.9}
  #allocation0 [shape = 's32[1]{0}', space=sflag, size = 0x4, scoped, tag = 'scoped memory for mul.9']
  %s0 = inlined_call_operand.vmem [shape: f32[8], index: 0, kind: input, shape index: {}]
  %s1 = inlined_call_operand.vmem [shape: f32[8], index: 1, kind: input, shape index: {}]
  %s2 = inlined_call_operand.vmem [shape: f32[8], index: 2, kind: output, shape index: {}]
  %v3 = vld [vmem:[%s0] sm:$0x1]
  %v4 = vld [vmem:[%s1] sm:$0x1]
  %5 = xla_tuple %v3, %v4
  %6 = xla_tuple %5
  %v7 = vmul.f32 %v3, %v4
  %8 = xla_tuple %v7
  %9 = vst [vmem:[%s2] sm:$0x1] %v7

// kernel: prunable_conv2d_forward.1
$region0: #{prunable_conv2d_forward.1}
  #allocation0 [shape = 'u32[]', space=smem, size = 0x4, offset = 0x4, fixed_abs, tag = 'smem constant byte address 0x4 - core index']
  #allocation1 [shape = 'u32[144,128]{1,0:T(1,128)}', space=vmem, size = 0x12000, scoped, tag = 'internal scratch']
  %s0 = inlined_call_operand.vmem [shape: bf16[2,18,18,4], index: 0, kind: input, shape index: {}]
  %s1 = inlined_call_operand.vmem [shape: bf16[36,128], index: 1, kind: input, shape index: {}]
  %s2 = inlined_call_operand.vmem [shape: f32[1,128], index: 2, kind: input, shape index: {}]
  %s3 = inlined_call_operand.vmem [shape: f32[2,16,16,128], index: 3, kind: output, shape index: {}]
  %s4 = sld [smem:[#allocation0]]
  $region45: #{prunable_conv2d_forward.1} parent=0
    _
  %s6 = ssub.s32 1, %s4
  %s7 = scalar_select 0, %s6, %s4
  loop: start=0, step=1, limit=4
  $region2: #{prunable_conv2d_forward.1} parent=0 // loop_pre_header
    _
  $region3: #{prunable_conv2d_forward.1} parent=0 // loop_header
    %s9 = sphi 0, %s13
    %p10 = scmp.ge.s32.totalorder %s9, 4
    %s16 = sphi 0, %s28
    %s17 = sphi 0, %s24
    %s18 = sphi 0, %s16
    %s19 = sphi 0, %s17
    %s20 = sphi 0, %s18
    %s21 = sphi 0, %s19
    %s31 = sphi 0, %s33
    %s34 = sphi 0, %s31
    %s35 = sphi 0, %s34
    %s51 = sphi 0, %s35
    %s55 = sphi 0, %s55
    %s57 = sphi 0, %s55
    %s58 = sphi 0, %s57
    %s72 = sphi 0, %s58
    %s76 = sphi 0, %s76
    %s78 = sphi 0, %s76
    %s79 = sphi 0, %s78
    %s93 = sphi 0, %s79
    %s101 = sphi 0, %s103
    %s104 = sphi 0, %s101
    %s105 = sphi 0, %s104
    %s121 = sphi 0, %s105
  $region4: #{prunable_conv2d_forward.1} parent=0 // loop_header_branch
    %12 = sbr.rel (%p10) target = $region8
  $region5: #{prunable_conv2d_forward.1} parent=0 // loop_body
    %s14 = ssub.s32 %s9, 1
    %s15 = ssub.s32 %s9, 2
    %s22 = sadd.s32 1, %s17
    %p23 = scmp.ge.s32.totalorder %s22, 1
    %s24 = scalar_select %p23, 0, %s22
    %s25 = sadd.s32 1, %s16
    %s26 = scalar_select %p23, %s25, %s16
    %p27 = scmp.ge.s32.totalorder %s26, 2
    %s28 = scalar_select %p27, 0, %s26
    %s29 = ssub.s32 %s16, %s28
    %p30 = scmp.eq.s32.totalorder %s29, 0
    %s32 = sadd.s32 %s31, 1
    %s33 = scalar_select %p30, %s31, %s32
    %p36 = pneg %p30
    %p37 = scmp.eq.s32.totalorder %s9, 1
    %p38 = por %p36, %p37
    %p39 = scmp.ne.s32.totalorder %s31, %s34
    %p40 = scmp.eq.s32.totalorder %s9, 0
    %p41 = por %p39, %p40
    %p42 = scmp.ne.s32.totalorder %s31, %s34
    %p43 = scmp.eq.s32.totalorder %s14, 1
    %p44 = por %p42, %p43
    %p45 = scmp.ne.s32.totalorder %s34, %s35
    %p46 = scmp.eq.s32.totalorder %s14, 0
    %p47 = por %p45, %p46
    %p48 = scmp.ne.s32.totalorder %s34, %s35
    %p49 = scmp.eq.s32.totalorder %s15, 1
    %p50 = por %p48, %p49
    %p52 = scmp.ne.s32.totalorder %s35, %s51
    %p53 = scmp.eq.s32.totalorder %s15, 0
    %p54 = por %p52, %p53
    %s56 = sadd.s32 %s55, 1
    %p59 = scmp.eq.s32.totalorder %s9, 1
    %p60 = scmp.ne.s32.totalorder %s55, %s57
    %p61 = scmp.eq.s32.totalorder %s9, 0
    %p62 = por %p60, %p61
    %p63 = scmp.ne.s32.totalorder %s55, %s57
    %p64 = scmp.eq.s32.totalorder %s14, 1
    %p65 = por %p63, %p64
    %p66 = scmp.ne.s32.totalorder %s57, %s58
    %p67 = scmp.eq.s32.totalorder %s14, 0
    %p68 = por %p66, %p67
    %p69 = scmp.ne.s32.totalorder %s57, %s58
    %p70 = scmp.eq.s32.totalorder %s15, 1
    %p71 = por %p69, %p70
    %p73 = scmp.ne.s32.totalorder %s58, %s72
    %p74 = scmp.eq.s32.totalorder %s15, 0
    %p75 = por %p73, %p74
    %s77 = sadd.s32 %s76, 1
    %p80 = scmp.eq.s32.totalorder %s9, 1
    %p81 = scmp.ne.s32.totalorder %s76, %s78
    %p82 = scmp.eq.s32.totalorder %s9, 0
    %p83 = por %p81, %p82
    %p84 = scmp.ne.s32.totalorder %s76, %s78
    %p85 = scmp.eq.s32.totalorder %s14, 1
    %p86 = por %p84, %p85
    %p87 = scmp.ne.s32.totalorder %s78, %s79
    %p88 = scmp.eq.s32.totalorder %s14, 0
    %p89 = por %p87, %p88
    %p90 = scmp.ne.s32.totalorder %s78, %s79
    %p91 = scmp.eq.s32.totalorder %s15, 1
    %p92 = por %p90, %p91
    %p94 = scmp.ne.s32.totalorder %s79, %s93
    %p95 = scmp.eq.s32.totalorder %s15, 0
    %p96 = por %p94, %p95
    %s97 = ssub.s32 %s16, %s28
    %s98 = ssub.s32 %s17, %s24
    %s99 = sor.u32 %s97, %s98
    %p100 = scmp.eq.s32.totalorder %s99, 0
    %s102 = sadd.s32 %s101, 1
    %s103 = scalar_select %p100, %s101, %s102
    %p106 = pneg %p100
    %p107 = scmp.eq.s32.totalorder %s9, 1
    %p108 = por %p106, %p107
    %p109 = scmp.ne.s32.totalorder %s101, %s104
    %p110 = scmp.eq.s32.totalorder %s9, 0
    %p111 = por %p109, %p110
    %p112 = scmp.ne.s32.totalorder %s101, %s104
    %p113 = scmp.eq.s32.totalorder %s14, 1
    %p114 = por %p112, %p113
    %p115 = scmp.ne.s32.totalorder %s104, %s105
    %p116 = scmp.eq.s32.totalorder %s14, 0
    %p117 = por %p115, %p116
    %p118 = scmp.ne.s32.totalorder %s104, %s105
    %p119 = scmp.eq.s32.totalorder %s15, 1
    %p120 = por %p118, %p119
    %p122 = scmp.ne.s32.totalorder %s105, %s121
    %p123 = scmp.eq.s32.totalorder %s15, 0
    %p124 = por %p122, %p123
    %p125 = scmp.le.s32.totalorder 1, %s9
    %p126 = scmp.lt.s32.totalorder %s9, 3
    %p127 = pnand %p125, %p126
    %p128 = pneg %p127
    // Predicated region
    $region9: #{prunable_conv2d_forward.1} parent=5 // pred_check
      _
    $region10: #{prunable_conv2d_forward.1} parent=5 // pred_check_branch
      %130 = sbr.rel (%p127) target = $region12
    $region11: #{prunable_conv2d_forward.1} parent=5 // pred_region
      %s131 = ssub.s32 %s9, 1
      // Predicated region
      $region13: #{prunable_conv2d_forward.1} parent=11 // pred_check
        %p132 = pneg %p68
      $region14: #{prunable_conv2d_forward.1} parent=11 // pred_check_branch
        %134 = sbr.rel (%p132) target = $region16
      $region15: #{prunable_conv2d_forward.1} parent=11 // pred_region
        _
      $region16: #{prunable_conv2d_forward.1} parent=11 // pred_fallthru
        _
      // Predicated region
      $region17: #{prunable_conv2d_forward.1} parent=11 // pred_check
        %p135 = pneg %p89
      $region18: #{prunable_conv2d_forward.1} parent=11 // pred_check_branch
        %137 = sbr.rel (%p135) target = $region20
      $region19: #{prunable_conv2d_forward.1} parent=11 // pred_region
        _
      $region20: #{prunable_conv2d_forward.1} parent=11 // pred_fallthru
        _
    $region12: #{prunable_conv2d_forward.1} parent=5 // pred_fallthru
      _
    %p138 = scmp.lt.s32.totalorder %s9, 2
    // Predicated region
    $region21: #{prunable_conv2d_forward.1} parent=5 // pred_check
      %p139 = pneg %p138
    $region22: #{prunable_conv2d_forward.1} parent=5 // pred_check_branch
      %141 = sbr.rel (%p139) target = $region24
    $region23: #{prunable_conv2d_forward.1} parent=5 // pred_region
      // Predicated region
      $region25: #{prunable_conv2d_forward.1} parent=23 // pred_check
        %p142 = pneg %p41
      $region26: #{prunable_conv2d_forward.1} parent=23 // pred_check_branch
        %144 = sbr.rel (%p142) target = $region28
      $region27: #{prunable_conv2d_forward.1} parent=23 // pred_region
        %p145 = scmp.lt.s32.totalorder %s16, 1
        %s146 = scalar_select %p145, %s16, 1
        %s147 = smul.addr %s146, 54
        %s148 = smul.addr %s147, 4
        %s149 = scalar_lea.vmem %s0, %s148
      $region28: #{prunable_conv2d_forward.1} parent=23 // pred_fallthru
        _
    $region24: #{prunable_conv2d_forward.1} parent=5 // pred_fallthru
      _
    %p150 = scmp.le.s32.totalorder 1, %s9
    %p151 = scmp.lt.s32.totalorder %s9, 3
    %p152 = pnand %p150, %p151
    %p153 = pneg %p152
    // Predicated region
    $region29: #{prunable_conv2d_forward.1} parent=5 // pred_check
      _
    $region30: #{prunable_conv2d_forward.1} parent=5 // pred_check_branch
      %155 = sbr.rel (%p152) target = $region32
    $region31: #{prunable_conv2d_forward.1} parent=5 // pred_region
      %s156 = ssub.s32 %s9, 1
      %p157 = scmp.lt.s32.totalorder %s18, 1
      %s158 = scalar_select %p157, %s18, 1
      %s159 = smul.addr %s158, 54
      %s160 = smul.addr %s159, 4
      %s161 = scalar_lea.vmem %s0, %s160
      %p162 = pneg %p47
      %p163 = pneg %p44
      %p164 = pneg %p68
      %p165 = pneg %p65
      %p166 = pneg %p89
      %p167 = pneg %p86
      %p168 = pneg %p117
      %p169 = pneg %p114
      %s170 = smul.u32 16, %s19
      %p171 = scmp.lt.s32.totalorder %s18, 1
      %s172 = scalar_select %p171, %s18, 1
      %p173 = scmp.lt.s32.totalorder %s170, 15
      %s174 = scalar_select %p173, %s170, 15
      %s175 = smul.addr %s174, 2
      %s176 = smul.addr %s172, 32
      %s177 = sadd.s32 %s175, %s176
      %s178 = smul.addr %s177, 8
      %s179 = scalar_lea.vmem %s3, %s178
      %p180 = scmp.lt.s32.totalorder %s18, 1
      %s181 = scalar_select %p180, %s18, 1
      %s182 = smul.addr %s181, 54
      %s183 = smul.addr %s182, 4
      %s184 = scalar_lea.vmem %s0, %s183
      %s185 = smul.u32 16, %s19
      %p186 = scmp.lt.s32.totalorder %s18, 1
      %s187 = scalar_select %p186, %s18, 1
      %p188 = scmp.lt.s32.totalorder %s185, 15
      %s189 = scalar_select %p188, %s185, 15
      %s190 = smul.addr %s189, 2
      %s191 = smul.addr %s187, 32
      %s192 = sadd.s32 %s190, %s191
      %s193 = smul.addr %s192, 8
      %s194 = scalar_lea.vmem %s3, %s193
      %s195 = smul.u32 16, %s19
      %s197 = smul.u32 %s19, 16
      %s198 = smul.u32 %s197, 3
      %s199 = smul.addr %s198, 4
      %s200 = scalar_lea.vmem %s184, %s199
      %v201 = vld [vmem:[%s200] sm:$0xf]
      %v202 = vld [vmem:[%s200 + $0x4] sm:$0xf]
      %v203 = vld [vmem:[%s200 + $0x8] sm:$0x1]
      %v204 = vld [vmem:[%s200 + $0xc] sm:$0xf]
      %v205 = vld [vmem:[%s200 + $0x10] sm:$0xf]
      %v206 = vld [vmem:[%s200 + $0x14] sm:$0x1]
      %v207 = vld [vmem:[%s200 + $0x18] sm:$0xf]
      %v208 = vld [vmem:[%s200 + $0x1c] sm:$0xf]
      %v209 = vld [vmem:[%s200 + $0x20] sm:$0x1]
      %v210 = vld [vmem:[%s200 + $0x24] sm:$0xf]
      %v211 = vld [vmem:[%s200 + $0x28] sm:$0xf]
      %v212 = vld [vmem:[%s200 + $0x2c] sm:$0x1]
      %v213 = vld [vmem:[%s200 + $0x30] sm:$0xf]
      %v214 = vld [vmem:[%s200 + $0x34] sm:$0xf]
      %v215 = vld [vmem:[%s200 + $0x38] sm:$0x1]
      %v216 = vld [vmem:[%s200 + $0x3c] sm:$0xf]
      %v217 = vld [vmem:[%s200 + $0x40] sm:$0xf]
      %v218 = vld [vmem:[%s200 + $0x44] sm:$0x1]
      %v219 = vld [vmem:[%s200 + $0x48] sm:$0xf]
      %v220 = vld [vmem:[%s200 + $0x4c] sm:$0xf]
      %v221 = vld [vmem:[%s200 + $0x50] sm:$0x1]
      %v222 = vld [vmem:[%s200 + $0x54] sm:$0xf]
      %v223 = vld [vmem:[%s200 + $0x58] sm:$0xf]
      %v224 = vld [vmem:[%s200 + $0x5c] sm:$0x1]
      %v225 = vld [vmem:[%s200 + $0x60] sm:$0xf]
      %v226 = vld [vmem:[%s200 + $0x64] sm:$0xf]
      %v227 = vld [vmem:[%s200 + $0x68] sm:$0x1]
      %v228 = vld [vmem:[%s200 + $0x6c] sm:$0xf]
      %v229 = vld [vmem:[%s200 + $0x70] sm:$0xf]
      %v230 = vld [vmem:[%s200 + $0x74] sm:$0x1]
      %v231 = vld [vmem:[%s200 + $0x78] sm:$0xf]
      %v232 = vld [vmem:[%s200 + $0x7c] sm:$0xf]
      %v233 = vld [vmem:[%s200 + $0x80] sm:$0x1]
      %v234 = vld [vmem:[%s200 + $0x84] sm:$0xf]
      %v235 = vld [vmem:[%s200 + $0x88] sm:$0xf]
      %v236 = vld [vmem:[%s200 + $0x8c] sm:$0x1]
      %v237 = vld [vmem:[%s200 + $0x90] sm:$0xf]
      %v238 = vld [vmem:[%s200 + $0x94] sm:$0xf]
      %v239 = vld [vmem:[%s200 + $0x98] sm:$0x1]
      %v240 = vld [vmem:[%s200 + $0x9c] sm:$0xf]
      %v241 = vld [vmem:[%s200 + $0xa0] sm:$0xf]
      %v242 = vld [vmem:[%s200 + $0xa4] sm:$0x1]
      %v243 = vld [vmem:[%s200 + $0xa8] sm:$0xf]
      %v244 = vld [vmem:[%s200 + $0xac] sm:$0xf]
      %v245 = vld [vmem:[%s200 + $0xb0] sm:$0x1]
      %v246 = vld [vmem:[%s200 + $0xb4] sm:$0xf]
      %v247 = vld [vmem:[%s200 + $0xb8] sm:$0xf]
      %v248 = vld [vmem:[%s200 + $0xbc] sm:$0x1]
      %vm249 = vsmask.f32 3328
      %vm250 = vsmask.f32 7440
      %vm251 = vmor %vm249, %vm250
      %v253 = vshrl.u32 %v201, 16
      %v255 = vrot.slane %v253, 4
      %v256 = vshll.u32 %v201, 16
      %v258 = vrot.slane %v256, 5
      %v259 = vor.u32 %v255, %v258
      %v260 = vrot.slane %v259, 4
      %v262 = vshll.u32 %v202, 16
      %v264 = vrot.slane %v262, 5
      %v265 = vsel %vm251, %v260, %v264
      %v266 = vshrl.u32 %v202, 16
      %v268 = vrot.slane %v266, 4
      %v269 = vor.u32 %v268, %v264
      %v270 = vrot.slane %v269, 4
      %v272 = vshll.u32 %v203, 16
      %v274 = vrot.slane %v272, 5
      %v275 = vsel %vm251, %v270, %v274
      %v277 = vshrl.u32 %v204, 16
      %v279 = vrot.slane %v277, 4
      %v280 = vshll.u32 %v204, 16
      %v282 = vrot.slane %v280, 5
      %v283 = vor.u32 %v279, %v282
      %v284 = vrot.slane %v283, 4
      %v286 = vshll.u32 %v205, 16
      %v288 = vrot.slane %v286, 5
      %v289 = vsel %vm251, %v284, %v288
      %v290 = vshrl.u32 %v205, 16
      %v292 = vrot.slane %v290, 4
      %v293 = vor.u32 %v292, %v288
      %v294 = vrot.slane %v293, 4
      %v296 = vshll.u32 %v206, 16
      %v298 = vrot.slane %v296, 5
      %v299 = vsel %vm251, %v294, %v298
      %v301 = vshrl.u32 %v207, 16
      %v303 = vrot.slane %v301, 4
      %v304 = vshll.u32 %v207, 16
      %v306 = vrot.slane %v304, 5
      %v307 = vor.u32 %v303, %v306
      %v308 = vrot.slane %v307, 4
      %v310 = vshll.u32 %v208, 16
      %v312 = vrot.slane %v310, 5
      %v313 = vsel %vm251, %v308, %v312
      %v314 = vshrl.u32 %v208, 16
      %v316 = vrot.slane %v314, 4
      %v317 = vor.u32 %v316, %v312
      %v318 = vrot.slane %v317, 4
      %v320 = vshll.u32 %v209, 16
      %v322 = vrot.slane %v320, 5
      %v323 = vsel %vm251, %v318, %v322
      %v325 = vshrl.u32 %v210, 16
      %v327 = vrot.slane %v325, 4
      %v328 = vshll.u32 %v210, 16
      %v330 = vrot.slane %v328, 5
      %v331 = vor.u32 %v327, %v330
      %v332 = vrot.slane %v331, 4
      %v334 = vshll.u32 %v211, 16
      %v336 = vrot.slane %v334, 5
      %v337 = vsel %vm251, %v332, %v336
      %v338 = vshrl.u32 %v211, 16
      %v340 = vrot.slane %v338, 4
      %v341 = vor.u32 %v340, %v336
      %v342 = vrot.slane %v341, 4
      %v344 = vshll.u32 %v212, 16
      %v346 = vrot.slane %v344, 5
      %v347 = vsel %vm251, %v342, %v346
      %v349 = vshrl.u32 %v213, 16
      %v351 = vrot.slane %v349, 4
      %v352 = vshll.u32 %v213, 16
      %v354 = vrot.slane %v352, 5
      %v355 = vor.u32 %v351, %v354
      %v356 = vrot.slane %v355, 4
      %v358 = vshll.u32 %v214, 16
      %v360 = vrot.slane %v358, 5
      %v361 = vsel %vm251, %v356, %v360
      %v362 = vshrl.u32 %v214, 16
      %v364 = vrot.slane %v362, 4
      %v365 = vor.u32 %v364, %v360
      %v366 = vrot.slane %v365, 4
      %v368 = vshll.u32 %v215, 16
      %v370 = vrot.slane %v368, 5
      %v371 = vsel %vm251, %v366, %v370
      %v373 = vshrl.u32 %v216, 16
      %v375 = vrot.slane %v373, 4
      %v376 = vshll.u32 %v216, 16
      %v378 = vrot.slane %v376, 5
      %v379 = vor.u32 %v375, %v378
      %v380 = vrot.slane %v379, 4
      %v382 = vshll.u32 %v217, 16
      %v384 = vrot.slane %v382, 5
      %v385 = vsel %vm251, %v380, %v384
      %v386 = vshrl.u32 %v217, 16
      %v388 = vrot.slane %v386, 4
      %v389 = vor.u32 %v388, %v384
      %v390 = vrot.slane %v389, 4
      %v392 = vshll.u32 %v218, 16
      %v394 = vrot.slane %v392, 5
      %v395 = vsel %vm251, %v390, %v394
      %v397 = vshrl.u32 %v219, 16
      %v399 = vrot.slane %v397, 4
      %v400 = vshll.u32 %v219, 16
      %v402 = vrot.slane %v400, 5
      %v403 = vor.u32 %v399, %v402
      %v404 = vrot.slane %v403, 4
      %v406 = vshll.u32 %v220, 16
      %v408 = vrot.slane %v406, 5
      %v409 = vsel %vm251, %v404, %v408
      %v410 = vshrl.u32 %v220, 16
      %v412 = vrot.slane %v410, 4
      %v413 = vor.u32 %v412, %v408
      %v414 = vrot.slane %v413, 4
      %v416 = vshll.u32 %v221, 16
      %v418 = vrot.slane %v416, 5
      %v419 = vsel %vm251, %v414, %v418
      %v421 = vshrl.u32 %v222, 16
      %v423 = vrot.slane %v421, 4
      %v424 = vshll.u32 %v222, 16
      %v426 = vrot.slane %v424, 5
      %v427 = vor.u32 %v423, %v426
      %v428 = vrot.slane %v427, 4
      %v430 = vshll.u32 %v223, 16
      %v432 = vrot.slane %v430, 5
      %v433 = vsel %vm251, %v428, %v432
      %v434 = vshrl.u32 %v223, 16
      %v436 = vrot.slane %v434, 4
      %v437 = vor.u32 %v436, %v432
      %v438 = vrot.slane %v437, 4
      %v440 = vshll.u32 %v224, 16
      %v442 = vrot.slane %v440, 5
      %v443 = vsel %vm251, %v438, %v442
      %v445 = vshrl.u32 %v225, 16
      %v447 = vrot.slane %v445, 4
      %v448 = vshll.u32 %v225, 16
      %v450 = vrot.slane %v448, 5
      %v451 = vor.u32 %v447, %v450
      %v452 = vrot.slane %v451, 4
      %v454 = vshll.u32 %v226, 16
      %v456 = vrot.slane %v454, 5
      %v457 = vsel %vm251, %v452, %v456
      %v458 = vshrl.u32 %v226, 16
      %v460 = vrot.slane %v458, 4
      %v461 = vor.u32 %v460, %v456
      %v462 = vrot.slane %v461, 4
      %v464 = vshll.u32 %v227, 16
      %v466 = vrot.slane %v464, 5
      %v467 = vsel %vm251, %v462, %v466
      %v469 = vshrl.u32 %v228, 16
      %v471 = vrot.slane %v469, 4
      %v472 = vshll.u32 %v228, 16
      %v474 = vrot.slane %v472, 5
      %v475 = vor.u32 %v471, %v474
      %v476 = vrot.slane %v475, 4
      %v478 = vshll.u32 %v229, 16
      %v480 = vrot.slane %v478, 5
      %v481 = vsel %vm251, %v476, %v480
      %v482 = vshrl.u32 %v229, 16
      %v484 = vrot.slane %v482, 4
      %v485 = vor.u32 %v484, %v480
      %v486 = vrot.slane %v485, 4
      %v488 = vshll.u32 %v230, 16
      %v490 = vrot.slane %v488, 5
      %v491 = vsel %vm251, %v486, %v490
      %v493 = vshrl.u32 %v231, 16
      %v495 = vrot.slane %v493, 4
      %v496 = vshll.u32 %v231, 16
      %v498 = vrot.slane %v496, 5
      %v499 = vor.u32 %v495, %v498
      %v500 = vrot.slane %v499, 4
      %v502 = vshll.u32 %v232, 16
      %v504 = vrot.slane %v502, 5
      %v505 = vsel %vm251, %v500, %v504
      %v506 = vshrl.u32 %v232, 16
      %v508 = vrot.slane %v506, 4
      %v509 = vor.u32 %v508, %v504
      %v510 = vrot.slane %v509, 4
      %v512 = vshll.u32 %v233, 16
      %v514 = vrot.slane %v512, 5
      %v515 = vsel %vm251, %v510, %v514
      %v517 = vshrl.u32 %v234, 16
      %v519 = vrot.slane %v517, 4
      %v520 = vshll.u32 %v234, 16
      %v522 = vrot.slane %v520, 5
      %v523 = vor.u32 %v519, %v522
      %v524 = vrot.slane %v523, 4
      %v526 = vshll.u32 %v235, 16
      %v528 = vrot.slane %v526, 5
      %v529 = vsel %vm251, %v524, %v528
      %v530 = vshrl.u32 %v235, 16
      %v532 = vrot.slane %v530, 4
      %v533 = vor.u32 %v532, %v528
      %v534 = vrot.slane %v533, 4
      %v536 = vshll.u32 %v236, 16
      %v538 = vrot.slane %v536, 5
      %v539 = vsel %vm251, %v534, %v538
      %v541 = vshrl.u32 %v237, 16
      %v543 = vrot.slane %v541, 4
      %v544 = vshll.u32 %v237, 16
      %v546 = vrot.slane %v544, 5
      %v547 = vor.u32 %v543, %v546
      %v548 = vrot.slane %v547, 4
      %v550 = vshll.u32 %v238, 16
      %v552 = vrot.slane %v550, 5
      %v553 = vsel %vm251, %v548, %v552
      %v554 = vshrl.u32 %v238, 16
      %v556 = vrot.slane %v554, 4
      %v557 = vor.u32 %v556, %v552
      %v558 = vrot.slane %v557, 4
      %v560 = vshll.u32 %v239, 16
      %v562 = vrot.slane %v560, 5
      %v563 = vsel %vm251, %v558, %v562
      %v565 = vshrl.u32 %v240, 16
      %v567 = vrot.slane %v565, 4
      %v568 = vshll.u32 %v240, 16
      %v570 = vrot.slane %v568, 5
      %v571 = vor.u32 %v567, %v570
      %v572 = vrot.slane %v571, 4
      %v574 = vshll.u32 %v241, 16
      %v576 = vrot.slane %v574, 5
      %v577 = vsel %vm251, %v572, %v576
      %v578 = vshrl.u32 %v241, 16
      %v580 = vrot.slane %v578, 4
      %v581 = vor.u32 %v580, %v576
      %v582 = vrot.slane %v581, 4
      %v584 = vshll.u32 %v242, 16
      %v586 = vrot.slane %v584, 5
      %v587 = vsel %vm251, %v582, %v586
      %v589 = vshrl.u32 %v243, 16
      %v591 = vrot.slane %v589, 4
      %v592 = vshll.u32 %v243, 16
      %v594 = vrot.slane %v592, 5
      %v595 = vor.u32 %v591, %v594
      %v596 = vrot.slane %v595, 4
      %v598 = vshll.u32 %v244, 16
      %v600 = vrot.slane %v598, 5
      %v601 = vsel %vm251, %v596, %v600
      %v602 = vshrl.u32 %v244, 16
      %v604 = vrot.slane %v602, 4
      %v605 = vor.u32 %v604, %v600
      %v606 = vrot.slane %v605, 4
      %v608 = vshll.u32 %v245, 16
      %v610 = vrot.slane %v608, 5
      %v611 = vsel %vm251, %v606, %v610
      %v613 = vshrl.u32 %v246, 16
      %v615 = vrot.slane %v613, 4
      %v616 = vshll.u32 %v246, 16
      %v618 = vrot.slane %v616, 5
      %v619 = vor.u32 %v615, %v618
      %v620 = vrot.slane %v619, 4
      %v622 = vshll.u32 %v247, 16
      %v624 = vrot.slane %v622, 5
      %v625 = vsel %vm251, %v620, %v624
      %v626 = vshrl.u32 %v247, 16
      %v628 = vrot.slane %v626, 4
      %v629 = vor.u32 %v628, %v624
      %v630 = vrot.slane %v629, 4
      %v632 = vshll.u32 %v248, 16
      %v634 = vrot.slane %v632, 5
      %v635 = vsel %vm251, %v630, %v634
      %vm684 = vcmask 1042432
      %vm685 = vcmask 1046532
      %vm686 = vmor %vm684, %vm685
      %v687 = vrot.slane %v201, 5
      %v688 = vrot.slane %v687, 4
      %v689 = vrot.slane %v202, 5
      %v690 = vsel %vm686, %v688, %v689
      %v691 = vrot.slane %v689, 4
      %v692 = vrot.slane %v203, 5
      %v693 = vsel %vm686, %v691, %v692
      %v694 = vrot.slane %v204, 5
      %v695 = vrot.slane %v694, 4
      %v696 = vrot.slane %v205, 5
      %v697 = vsel %vm686, %v695, %v696
      %v698 = vrot.slane %v696, 4
      %v699 = vrot.slane %v206, 5
      %v700 = vsel %vm686, %v698, %v699
      %v701 = vrot.slane %v207, 5
      %v702 = vrot.slane %v701, 4
      %v703 = vrot.slane %v208, 5
      %v704 = vsel %vm686, %v702, %v703
      %v705 = vrot.slane %v703, 4
      %v706 = vrot.slane %v209, 5
      %v707 = vsel %vm686, %v705, %v706
      %v708 = vrot.slane %v210, 5
      %v709 = vrot.slane %v708, 4
      %v710 = vrot.slane %v211, 5
      %v711 = vsel %vm686, %v709, %v710
      %v712 = vrot.slane %v710, 4
      %v713 = vrot.slane %v212, 5
      %v714 = vsel %vm686, %v712, %v713
      %v715 = vrot.slane %v213, 5
      %v716 = vrot.slane %v715, 4
      %v717 = vrot.slane %v214, 5
      %v718 = vsel %vm686, %v716, %v717
      %v719 = vrot.slane %v717, 4
      %v720 = vrot.slane %v215, 5
      %v721 = vsel %vm686, %v719, %v720
      %v722 = vrot.slane %v216, 5
      %v723 = vrot.slane %v722, 4
      %v724 = vrot.slane %v217, 5
      %v725 = vsel %vm686, %v723, %v724
      %v726 = vrot.slane %v724, 4
      %v727 = vrot.slane %v218, 5
      %v728 = vsel %vm686, %v726, %v727
      %v729 = vrot.slane %v219, 5
      %v730 = vrot.slane %v729, 4
      %v731 = vrot.slane %v220, 5
      %v732 = vsel %vm686, %v730, %v731
      %v733 = vrot.slane %v731, 4
      %v734 = vrot.slane %v221, 5
      %v735 = vsel %vm686, %v733, %v734
      %v736 = vrot.slane %v222, 5
      %v737 = vrot.slane %v736, 4
      %v738 = vrot.slane %v223, 5
      %v739 = vsel %vm686, %v737, %v738
      %v740 = vrot.slane %v738, 4
      %v741 = vrot.slane %v224, 5
      %v742 = vsel %vm686, %v740, %v741
      %v743 = vrot.slane %v225, 5
      %v744 = vrot.slane %v743, 4
      %v745 = vrot.slane %v226, 5
      %v746 = vsel %vm686, %v744, %v745
      %v747 = vrot.slane %v745, 4
      %v748 = vrot.slane %v227, 5
      %v749 = vsel %vm686, %v747, %v748
      %v750 = vrot.slane %v228, 5
      %v751 = vrot.slane %v750, 4
      %v752 = vrot.slane %v229, 5
      %v753 = vsel %vm686, %v751, %v752
      %v754 = vrot.slane %v752, 4
      %v755 = vrot.slane %v230, 5
      %v756 = vsel %vm686, %v754, %v755
      %v757 = vrot.slane %v231, 5
      %v758 = vrot.slane %v757, 4
      %v759 = vrot.slane %v232, 5
      %v760 = vsel %vm686, %v758, %v759
      %v761 = vrot.slane %v759, 4
      %v762 = vrot.slane %v233, 5
      %v763 = vsel %vm686, %v761, %v762
      %v764 = vrot.slane %v234, 5
      %v765 = vrot.slane %v764, 4
      %v766 = vrot.slane %v235, 5
      %v767 = vsel %vm686, %v765, %v766
      %v768 = vrot.slane %v766, 4
      %v769 = vrot.slane %v236, 5
      %v770 = vsel %vm686, %v768, %v769
      %v771 = vrot.slane %v237, 5
      %v772 = vrot.slane %v771, 4
      %v773 = vrot.slane %v238, 5
      %v774 = vsel %vm686, %v772, %v773
      %v775 = vrot.slane %v773, 4
      %v776 = vrot.slane %v239, 5
      %v777 = vsel %vm686, %v775, %v776
      %v778 = vrot.slane %v240, 5
      %v779 = vrot.slane %v778, 4
      %v780 = vrot.slane %v241, 5
      %v781 = vsel %vm686, %v779, %v780
      %v782 = vrot.slane %v780, 4
      %v783 = vrot.slane %v242, 5
      %v784 = vsel %vm686, %v782, %v783
      %v785 = vrot.slane %v243, 5
      %v786 = vrot.slane %v785, 4
      %v787 = vrot.slane %v244, 5
      %v788 = vsel %vm686, %v786, %v787
      %v789 = vrot.slane %v787, 4
      %v790 = vrot.slane %v245, 5
      %v791 = vsel %vm686, %v789, %v790
      %v792 = vrot.slane %v246, 5
      %v793 = vrot.slane %v792, 4
      %v794 = vrot.slane %v247, 5
      %v795 = vsel %vm686, %v793, %v794
      %v796 = vrot.slane %v794, 4
      %v797 = vrot.slane %v248, 5
      %v798 = vsel %vm686, %v796, %v797
      %s799 = sadd.s32 %s197, 1
      %s800 = smul.u32 %s799, 3
      %s801 = smul.addr %s800, 4
      %s802 = scalar_lea.vmem %s184, %s801
      %v803 = vld [vmem:[%s802] sm:$0xf]
      %v804 = vld [vmem:[%s802 + $0x4] sm:$0xf]
      %v805 = vld [vmem:[%s802 + $0x8] sm:$0x1]
      %v806 = vld [vmem:[%s802 + $0xc] sm:$0xf]
      %v807 = vld [vmem:[%s802 + $0x10] sm:$0xf]
      %v808 = vld [vmem:[%s802 + $0x14] sm:$0x1]
      %v809 = vld [vmem:[%s802 + $0x18] sm:$0xf]
      %v810 = vld [vmem:[%s802 + $0x1c] sm:$0xf]
      %v811 = vld [vmem:[%s802 + $0x20] sm:$0x1]
      %v812 = vld [vmem:[%s802 + $0x24] sm:$0xf]
      %v813 = vld [vmem:[%s802 + $0x28] sm:$0xf]
      %v814 = vld [vmem:[%s802 + $0x2c] sm:$0x1]
      %v815 = vld [vmem:[%s802 + $0x30] sm:$0xf]
      %v816 = vld [vmem:[%s802 + $0x34] sm:$0xf]
      %v817 = vld [vmem:[%s802 + $0x38] sm:$0x1]
      %v818 = vld [vmem:[%s802 + $0x3c] sm:$0xf]
      %v819 = vld [vmem:[%s802 + $0x40] sm:$0xf]
      %v820 = vld [vmem:[%s802 + $0x44] sm:$0x1]
      %v821 = vld [vmem:[%s802 + $0x48] sm:$0xf]
      %v822 = vld [vmem:[%s802 + $0x4c] sm:$0xf]
      %v823 = vld [vmem:[%s802 + $0x50] sm:$0x1]
      %v824 = vld [vmem:[%s802 + $0x54] sm:$0xf]
      %v825 = vld [vmem:[%s802 + $0x58] sm:$0xf]
      %v826 = vld [vmem:[%s802 + $0x5c] sm:$0x1]
      %v827 = vld [vmem:[%s802 + $0x60] sm:$0xf]
      %v828 = vld [vmem:[%s802 + $0x64] sm:$0xf]
      %v829 = vld [vmem:[%s802 + $0x68] sm:$0x1]
      %v830 = vld [vmem:[%s802 + $0x6c] sm:$0xf]
      %v831 = vld [vmem:[%s802 + $0x70] sm:$0xf]
      %v832 = vld [vmem:[%s802 + $0x74] sm:$0x1]
      %v833 = vld [vmem:[%s802 + $0x78] sm:$0xf]
      %v834 = vld [vmem:[%s802 + $0x7c] sm:$0xf]
      %v835 = vld [vmem:[%s802 + $0x80] sm:$0x1]
      %v836 = vld [vmem:[%s802 + $0x84] sm:$0xf]
      %v837 = vld [vmem:[%s802 + $0x88] sm:$0xf]
      %v838 = vld [vmem:[%s802 + $0x8c] sm:$0x1]
      %v839 = vld [vmem:[%s802 + $0x90] sm:$0xf]
      %v840 = vld [vmem:[%s802 + $0x94] sm:$0xf]
      %v841 = vld [vmem:[%s802 + $0x98] sm:$0x1]
      %v842 = vld [vmem:[%s802 + $0x9c] sm:$0xf]
      %v843 = vld [vmem:[%s802 + $0xa0] sm:$0xf]
      %v844 = vld [vmem:[%s802 + $0xa4] sm:$0x1]
      %v845 = vld [vmem:[%s802 + $0xa8] sm:$0xf]
      %v846 = vld [vmem:[%s802 + $0xac] sm:$0xf]
      %v847 = vld [vmem:[%s802 + $0xb0] sm:$0x1]
      %v848 = vld [vmem:[%s802 + $0xb4] sm:$0xf]
      %v849 = vld [vmem:[%s802 + $0xb8] sm:$0xf]
      %v850 = vld [vmem:[%s802 + $0xbc] sm:$0x1]
      %v852 = vshrl.u32 %v803, 16
      %v854 = vrot.slane %v852, 4
      %v855 = vshll.u32 %v803, 16
      %v857 = vrot.slane %v855, 5
      %v858 = vor.u32 %v854, %v857
      %v859 = vrot.slane %v858, 4
      %v861 = vshll.u32 %v804, 16
      %v863 = vrot.slane %v861, 5
      %v864 = vsel %vm251, %v859, %v863
      %v865 = vshrl.u32 %v804, 16
      %v867 = vrot.slane %v865, 4
      %v868 = vor.u32 %v867, %v863
      %v869 = vrot.slane %v868, 4
      %v871 = vshll.u32 %v805, 16
      %v873 = vrot.slane %v871, 5
      %v874 = vsel %vm251, %v869, %v873
      %v876 = vshrl.u32 %v806, 16
      %v878 = vrot.slane %v876, 4
      %v879 = vshll.u32 %v806, 16
      %v881 = vrot.slane %v879, 5
      %v882 = vor.u32 %v878, %v881
      %v883 = vrot.slane %v882, 4
      %v885 = vshll.u32 %v807, 16
      %v887 = vrot.slane %v885, 5
      %v888 = vsel %vm251, %v883, %v887
      %v889 = vshrl.u32 %v807, 16
      %v891 = vrot.slane %v889, 4
      %v892 = vor.u32 %v891, %v887
      %v893 = vrot.slane %v892, 4
      %v895 = vshll.u32 %v808, 16
      %v897 = vrot.slane %v895, 5
      %v898 = vsel %vm251, %v893, %v897
      %v900 = vshrl.u32 %v809, 16
      %v902 = vrot.slane %v900, 4
      %v903 = vshll.u32 %v809, 16
      %v905 = vrot.slane %v903, 5
      %v906 = vor.u32 %v902, %v905
      %v907 = vrot.slane %v906, 4
      %v909 = vshll.u32 %v810, 16
      %v911 = vrot.slane %v909, 5
      %v912 = vsel %vm251, %v907, %v911
      %v913 = vshrl.u32 %v810, 16
      %v915 = vrot.slane %v913, 4
      %v916 = vor.u32 %v915, %v911
      %v917 = vrot.slane %v916, 4
      %v919 = vshll.u32 %v811, 16
      %v921 = vrot.slane %v919, 5
      %v922 = vsel %vm251, %v917, %v921
      %v924 = vshrl.u32 %v812, 16
      %v926 = vrot.slane %v924, 4
      %v927 = vshll.u32 %v812, 16
      %v929 = vrot.slane %v927, 5
      %v930 = vor.u32 %v926, %v929
      %v931 = vrot.slane %v930, 4
      %v933 = vshll.u32 %v813, 16
      %v935 = vrot.slane %v933, 5
      %v936 = vsel %vm251, %v931, %v935
      %v937 = vshrl.u32 %v813, 16
      %v939 = vrot.slane %v937, 4
      %v940 = vor.u32 %v939, %v935
      %v941 = vrot.slane %v940, 4
      %v943 = vshll.u32 %v814, 16
      %v945 = vrot.slane %v943, 5
      %v946 = vsel %vm251, %v941, %v945
      %v948 = vshrl.u32 %v815, 16
      %v950 = vrot.slane %v948, 4
      %v951 = vshll.u32 %v815, 16
      %v953 = vrot.slane %v951, 5
      %v954 = vor.u32 %v950, %v953
      %v955 = vrot.slane %v954, 4
      %v957 = vshll.u32 %v816, 16
      %v959 = vrot.slane %v957, 5
      %v960 = vsel %vm251, %v955, %v959
      %v961 = vshrl.u32 %v816, 16
      %v963 = vrot.slane %v961, 4
      %v964 = vor.u32 %v963, %v959
      %v965 = vrot.slane %v964, 4
      %v967 = vshll.u32 %v817, 16
      %v969 = vrot.slane %v967, 5
      %v970 = vsel %vm251, %v965, %v969
      %v972 = vshrl.u32 %v818, 16
      %v974 = vrot.slane %v972, 4
      %v975 = vshll.u32 %v818, 16
      %v977 = vrot.slane %v975, 5
      %v978 = vor.u32 %v974, %v977
      %v979 = vrot.slane %v978, 4
      %v981 = vshll.u32 %v819, 16
      %v983 = vrot.slane %v981, 5
      %v984 = vsel %vm251, %v979, %v983
      %v985 = vshrl.u32 %v819, 16
      %v987 = vrot.slane %v985, 4
      %v988 = vor.u32 %v987, %v983
      %v989 = vrot.slane %v988, 4
      %v991 = vshll.u32 %v820, 16
      %v993 = vrot.slane %v991, 5
      %v994 = vsel %vm251, %v989, %v993
      %v996 = vshrl.u32 %v821, 16
      %v998 = vrot.slane %v996, 4
      %v999 = vshll.u32 %v821, 16
      %v1001 = vrot.slane %v999, 5
      %v1002 = vor.u32 %v998, %v1001
      %v1003 = vrot.slane %v1002, 4
      %v1005 = vshll.u32 %v822, 16
      %v1007 = vrot.slane %v1005, 5
      %v1008 = vsel %vm251, %v1003, %v1007
      %v1009 = vshrl.u32 %v822, 16
      %v1011 = vrot.slane %v1009, 4
      %v1012 = vor.u32 %v1011, %v1007
      %v1013 = vrot.slane %v1012, 4
      %v1015 = vshll.u32 %v823, 16
      %v1017 = vrot.slane %v1015, 5
      %v1018 = vsel %vm251, %v1013, %v1017
      %v1020 = vshrl.u32 %v824, 16
      %v1022 = vrot.slane %v1020, 4
      %v1023 = vshll.u32 %v824, 16
      %v1025 = vrot.slane %v1023, 5
      %v1026 = vor.u32 %v1022, %v1025
      %v1027 = vrot.slane %v1026, 4
      %v1029 = vshll.u32 %v825, 16
      %v1031 = vrot.slane %v1029, 5
      %v1032 = vsel %vm251, %v1027, %v1031
      %v1033 = vshrl.u32 %v825, 16
      %v1035 = vrot.slane %v1033, 4
      %v1036 = vor.u32 %v1035, %v1031
      %v1037 = vrot.slane %v1036, 4
      %v1039 = vshll.u32 %v826, 16
      %v1041 = vrot.slane %v1039, 5
      %v1042 = vsel %vm251, %v1037, %v1041
      %v1044 = vshrl.u32 %v827, 16
      %v1046 = vrot.slane %v1044, 4
      %v1047 = vshll.u32 %v827, 16
      %v1049 = vrot.slane %v1047, 5
      %v1050 = vor.u32 %v1046, %v1049
      %v1051 = vrot.slane %v1050, 4
      %v1053 = vshll.u32 %v828, 16
      %v1055 = vrot.slane %v1053, 5
      %v1056 = vsel %vm251, %v1051, %v1055
      %v1057 = vshrl.u32 %v828, 16
      %v1059 = vrot.slane %v1057, 4
      %v1060 = vor.u32 %v1059, %v1055
      %v1061 = vrot.slane %v1060, 4
      %v1063 = vshll.u32 %v829, 16
      %v1065 = vrot.slane %v1063, 5
      %v1066 = vsel %vm251, %v1061, %v1065
      %v1068 = vshrl.u32 %v830, 16
      %v1070 = vrot.slane %v1068, 4
      %v1071 = vshll.u32 %v830, 16
      %v1073 = vrot.slane %v1071, 5
      %v1074 = vor.u32 %v1070, %v1073
      %v1075 = vrot.slane %v1074, 4
      %v1077 = vshll.u32 %v831, 16
      %v1079 = vrot.slane %v1077, 5
      %v1080 = vsel %vm251, %v1075, %v1079
      %v1081 = vshrl.u32 %v831, 16
      %v1083 = vrot.slane %v1081, 4
      %v1084 = vor.u32 %v1083, %v1079
      %v1085 = vrot.slane %v1084, 4
      %v1087 = vshll.u32 %v832, 16
      %v1089 = vrot.slane %v1087, 5
      %v1090 = vsel %vm251, %v1085, %v1089
      %v1092 = vshrl.u32 %v833, 16
      %v1094 = vrot.slane %v1092, 4
      %v1095 = vshll.u32 %v833, 16
      %v1097 = vrot.slane %v1095, 5
      %v1098 = vor.u32 %v1094, %v1097
      %v1099 = vrot.slane %v1098, 4
      %v1101 = vshll.u32 %v834, 16
      %v1103 = vrot.slane %v1101, 5
      %v1104 = vsel %vm251, %v1099, %v1103
      %v1105 = vshrl.u32 %v834, 16
      %v1107 = vrot.slane %v1105, 4
      %v1108 = vor.u32 %v1107, %v1103
      %v1109 = vrot.slane %v1108, 4
      %v1111 = vshll.u32 %v835, 16
      %v1113 = vrot.slane %v1111, 5
      %v1114 = vsel %vm251, %v1109, %v1113
      %v1116 = vshrl.u32 %v836, 16
      %v1118 = vrot.slane %v1116, 4
      %v1119 = vshll.u32 %v836, 16
      %v1121 = vrot.slane %v1119, 5
      %v1122 = vor.u32 %v1118, %v1121
      %v1123 = vrot.slane %v1122, 4
      %v1125 = vshll.u32 %v837, 16
      %v1127 = vrot.slane %v1125, 5
      %v1128 = vsel %vm251, %v1123, %v1127
      %v1129 = vshrl.u32 %v837, 16
      %v1131 = vrot.slane %v1129, 4
      %v1132 = vor.u32 %v1131, %v1127
      %v1133 = vrot.slane %v1132, 4
      %v1135 = vshll.u32 %v838, 16
      %v1137 = vrot.slane %v1135, 5
      %v1138 = vsel %vm251, %v1133, %v1137
      %v1140 = vshrl.u32 %v839, 16
      %v1142 = vrot.slane %v1140, 4
      %v1143 = vshll.u32 %v839, 16
      %v1145 = vrot.slane %v1143, 5
      %v1146 = vor.u32 %v1142, %v1145
      %v1147 = vrot.slane %v1146, 4
      %v1149 = vshll.u32 %v840, 16
      %v1151 = vrot.slane %v1149, 5
      %v1152 = vsel %vm251, %v1147, %v1151
      %v1153 = vshrl.u32 %v840, 16
      %v1155 = vrot.slane %v1153, 4
      %v1156 = vor.u32 %v1155, %v1151
      %v1157 = vrot.slane %v1156, 4
      %v1159 = vshll.u32 %v841, 16
      %v1161 = vrot.slane %v1159, 5
      %v1162 = vsel %vm251, %v1157, %v1161
      %v1164 = vshrl.u32 %v842, 16
      %v1166 = vrot.slane %v1164, 4
      %v1167 = vshll.u32 %v842, 16
      %v1169 = vrot.slane %v1167, 5
      %v1170 = vor.u32 %v1166, %v1169
      %v1171 = vrot.slane %v1170, 4
      %v1173 = vshll.u32 %v843, 16
      %v1175 = vrot.slane %v1173, 5
      %v1176 = vsel %vm251, %v1171, %v1175
      %v1177 = vshrl.u32 %v843, 16
      %v1179 = vrot.slane %v1177, 4
      %v1180 = vor.u32 %v1179, %v1175
      %v1181 = vrot.slane %v1180, 4
      %v1183 = vshll.u32 %v844, 16
      %v1185 = vrot.slane %v1183, 5
      %v1186 = vsel %vm251, %v1181, %v1185
      %v1188 = vshrl.u32 %v845, 16
      %v1190 = vrot.slane %v1188, 4
      %v1191 = vshll.u32 %v845, 16
      %v1193 = vrot.slane %v1191, 5
      %v1194 = vor.u32 %v1190, %v1193
      %v1195 = vrot.slane %v1194, 4
      %v1197 = vshll.u32 %v846, 16
      %v1199 = vrot.slane %v1197, 5
      %v1200 = vsel %vm251, %v1195, %v1199
      %v1201 = vshrl.u32 %v846, 16
      %v1203 = vrot.slane %v1201, 4
      %v1204 = vor.u32 %v1203, %v1199
      %v1205 = vrot.slane %v1204, 4
      %v1207 = vshll.u32 %v847, 16
      %v1209 = vrot.slane %v1207, 5
      %v1210 = vsel %vm251, %v1205, %v1209
      %v1212 = vshrl.u32 %v848, 16
      %v1214 = vrot.slane %v1212, 4
      %v1215 = vshll.u32 %v848, 16
      %v1217 = vrot.slane %v1215, 5
      %v1218 = vor.u32 %v1214, %v1217
      %v1219 = vrot.slane %v1218, 4
      %v1221 = vshll.u32 %v849, 16
      %v1223 = vrot.slane %v1221, 5
      %v1224 = vsel %vm251, %v1219, %v1223
      %v1225 = vshrl.u32 %v849, 16
      %v1227 = vrot.slane %v1225, 4
      %v1228 = vor.u32 %v1227, %v1223
      %v1229 = vrot.slane %v1228, 4
      %v1231 = vshll.u32 %v850, 16
      %v1233 = vrot.slane %v1231, 5
      %v1234 = vsel %vm251, %v1229, %v1233
      %v1283 = vrot.slane %v803, 5
      %v1284 = vrot.slane %v1283, 4
      %v1285 = vrot.slane %v804, 5
      %v1286 = vsel %vm686, %v1284, %v1285
      %v1287 = vrot.slane %v1285, 4
      %v1288 = vrot.slane %v805, 5
      %v1289 = vsel %vm686, %v1287, %v1288
      %v1290 = vrot.slane %v806, 5
      %v1291 = vrot.slane %v1290, 4
      %v1292 = vrot.slane %v807, 5
      %v1293 = vsel %vm686, %v1291, %v1292
      %v1294 = vrot.slane %v1292, 4
      %v1295 = vrot.slane %v808, 5
      %v1296 = vsel %vm686, %v1294, %v1295
      %v1297 = vrot.slane %v809, 5
      %v1298 = vrot.slane %v1297, 4
      %v1299 = vrot.slane %v810, 5
      %v1300 = vsel %vm686, %v1298, %v1299
      %v1301 = vrot.slane %v1299, 4
      %v1302 = vrot.slane %v811, 5
      %v1303 = vsel %vm686, %v1301, %v1302
      %v1304 = vrot.slane %v812, 5
      %v1305 = vrot.slane %v1304, 4
      %v1306 = vrot.slane %v813, 5
      %v1307 = vsel %vm686, %v1305, %v1306
      %v1308 = vrot.slane %v1306, 4
      %v1309 = vrot.slane %v814, 5
      %v1310 = vsel %vm686, %v1308, %v1309
      %v1311 = vrot.slane %v815, 5
      %v1312 = vrot.slane %v1311, 4
      %v1313 = vrot.slane %v816, 5
      %v1314 = vsel %vm686, %v1312, %v1313
      %v1315 = vrot.slane %v1313, 4
      %v1316 = vrot.slane %v817, 5
      %v1317 = vsel %vm686, %v1315, %v1316
      %v1318 = vrot.slane %v818, 5
      %v1319 = vrot.slane %v1318, 4
      %v1320 = vrot.slane %v819, 5
      %v1321 = vsel %vm686, %v1319, %v1320
      %v1322 = vrot.slane %v1320, 4
      %v1323 = vrot.slane %v820, 5
      %v1324 = vsel %vm686, %v1322, %v1323
      %v1325 = vrot.slane %v821, 5
      %v1326 = vrot.slane %v1325, 4
      %v1327 = vrot.slane %v822, 5
      %v1328 = vsel %vm686, %v1326, %v1327
      %v1329 = vrot.slane %v1327, 4
      %v1330 = vrot.slane %v823, 5
      %v1331 = vsel %vm686, %v1329, %v1330
      %v1332 = vrot.slane %v824, 5
      %v1333 = vrot.slane %v1332, 4
      %v1334 = vrot.slane %v825, 5
      %v1335 = vsel %vm686, %v1333, %v1334
      %v1336 = vrot.slane %v1334, 4
      %v1337 = vrot.slane %v826, 5
      %v1338 = vsel %vm686, %v1336, %v1337
      %v1339 = vrot.slane %v827, 5
      %v1340 = vrot.slane %v1339, 4
      %v1341 = vrot.slane %v828, 5
      %v1342 = vsel %vm686, %v1340, %v1341
      %v1343 = vrot.slane %v1341, 4
      %v1344 = vrot.slane %v829, 5
      %v1345 = vsel %vm686, %v1343, %v1344
      %v1346 = vrot.slane %v830, 5
      %v1347 = vrot.slane %v1346, 4
      %v1348 = vrot.slane %v831, 5
      %v1349 = vsel %vm686, %v1347, %v1348
      %v1350 = vrot.slane %v1348, 4
      %v1351 = vrot.slane %v832, 5
      %v1352 = vsel %vm686, %v1350, %v1351
      %v1353 = vrot.slane %v833, 5
      %v1354 = vrot.slane %v1353, 4
      %v1355 = vrot.slane %v834, 5
      %v1356 = vsel %vm686, %v1354, %v1355
      %v1357 = vrot.slane %v1355, 4
      %v1358 = vrot.slane %v835, 5
      %v1359 = vsel %vm686, %v1357, %v1358
      %v1360 = vrot.slane %v836, 5
      %v1361 = vrot.slane %v1360, 4
      %v1362 = vrot.slane %v837, 5
      %v1363 = vsel %vm686, %v1361, %v1362
      %v1364 = vrot.slane %v1362, 4
      %v1365 = vrot.slane %v838, 5
      %v1366 = vsel %vm686, %v1364, %v1365
      %v1367 = vrot.slane %v839, 5
      %v1368 = vrot.slane %v1367, 4
      %v1369 = vrot.slane %v840, 5
      %v1370 = vsel %vm686, %v1368, %v1369
      %v1371 = vrot.slane %v1369, 4
      %v1372 = vrot.slane %v841, 5
      %v1373 = vsel %vm686, %v1371, %v1372
      %v1374 = vrot.slane %v842, 5
      %v1375 = vrot.slane %v1374, 4
      %v1376 = vrot.slane %v843, 5
      %v1377 = vsel %vm686, %v1375, %v1376
      %v1378 = vrot.slane %v1376, 4
      %v1379 = vrot.slane %v844, 5
      %v1380 = vsel %vm686, %v1378, %v1379
      %v1381 = vrot.slane %v845, 5
      %v1382 = vrot.slane %v1381, 4
      %v1383 = vrot.slane %v846, 5
      %v1384 = vsel %vm686, %v1382, %v1383
      %v1385 = vrot.slane %v1383, 4
      %v1386 = vrot.slane %v847, 5
      %v1387 = vsel %vm686, %v1385, %v1386
      %v1388 = vrot.slane %v848, 5
      %v1389 = vrot.slane %v1388, 4
      %v1390 = vrot.slane %v849, 5
      %v1391 = vsel %vm686, %v1389, %v1390
      %v1392 = vrot.slane %v1390, 4
      %v1393 = vrot.slane %v850, 5
      %v1394 = vsel %vm686, %v1392, %v1393
      %s1395 = sadd.s32 %s197, 2
      %s1396 = smul.u32 %s1395, 3
      %s1397 = smul.addr %s1396, 4
      %s1398 = scalar_lea.vmem %s184, %s1397
      %v1399 = vld [vmem:[%s1398] sm:$0xf]
      %v1400 = vld [vmem:[%s1398 + $0x4] sm:$0xf]
      %v1401 = vld [vmem:[%s1398 + $0x8] sm:$0x1]
      %v1402 = vld [vmem:[%s1398 + $0xc] sm:$0xf]
      %v1403 = vld [vmem:[%s1398 + $0x10] sm:$0xf]
      %v1404 = vld [vmem:[%s1398 + $0x14] sm:$0x1]
      %v1405 = vld [vmem:[%s1398 + $0x18] sm:$0xf]
      %v1406 = vld [vmem:[%s1398 + $0x1c] sm:$0xf]
      %v1407 = vld [vmem:[%s1398 + $0x20] sm:$0x1]
      %v1408 = vld [vmem:[%s1398 + $0x24] sm:$0xf]
      %v1409 = vld [vmem:[%s1398 + $0x28] sm:$0xf]
      %v1410 = vld [vmem:[%s1398 + $0x2c] sm:$0x1]
      %v1411 = vld [vmem:[%s1398 + $0x30] sm:$0xf]
      %v1412 = vld [vmem:[%s1398 + $0x34] sm:$0xf]
      %v1413 = vld [vmem:[%s1398 + $0x38] sm:$0x1]
      %v1414 = vld [vmem:[%s1398 + $0x3c] sm:$0xf]
      %v1415 = vld [vmem:[%s1398 + $0x40] sm:$0xf]
      %v1416 = vld [vmem:[%s1398 + $0x44] sm:$0x1]
      %v1417 = vld [vmem:[%s1398 + $0x48] sm:$0xf]
      %v1418 = vld [vmem:[%s1398 + $0x4c] sm:$0xf]
      %v1419 = vld [vmem:[%s1398 + $0x50] sm:$0x1]
      %v1420 = vld [vmem:[%s1398 + $0x54] sm:$0xf]
      %v1421 = vld [vmem:[%s1398 + $0x58] sm:$0xf]
      %v1422 = vld [vmem:[%s1398 + $0x5c] sm:$0x1]
      %v1423 = vld [vmem:[%s1398 + $0x60] sm:$0xf]
      %v1424 = vld [vmem:[%s1398 + $0x64] sm:$0xf]
      %v1425 = vld [vmem:[%s1398 + $0x68] sm:$0x1]
      %v1426 = vld [vmem:[%s1398 + $0x6c] sm:$0xf]
      %v1427 = vld [vmem:[%s1398 + $0x70] sm:$0xf]
      %v1428 = vld [vmem:[%s1398 + $0x74] sm:$0x1]
      %v1429 = vld [vmem:[%s1398 + $0x78] sm:$0xf]
      %v1430 = vld [vmem:[%s1398 + $0x7c] sm:$0xf]
      %v1431 = vld [vmem:[%s1398 + $0x80] sm:$0x1]
      %v1432 = vld [vmem:[%s1398 + $0x84] sm:$0xf]
      %v1433 = vld [vmem:[%s1398 + $0x88] sm:$0xf]
      %v1434 = vld [vmem:[%s1398 + $0x8c] sm:$0x1]
      %v1435 = vld [vmem:[%s1398 + $0x90] sm:$0xf]
      %v1436 = vld [vmem:[%s1398 + $0x94] sm:$0xf]
      %v1437 = vld [vmem:[%s1398 + $0x98] sm:$0x1]
      %v1438 = vld [vmem:[%s1398 + $0x9c] sm:$0xf]
      %v1439 = vld [vmem:[%s1398 + $0xa0] sm:$0xf]
      %v1440 = vld [vmem:[%s1398 + $0xa4] sm:$0x1]
      %v1441 = vld [vmem:[%s1398 + $0xa8] sm:$0xf]
      %v1442 = vld [vmem:[%s1398 + $0xac] sm:$0xf]
      %v1443 = vld [vmem:[%s1398 + $0xb0] sm:$0x1]
      %v1444 = vld [vmem:[%s1398 + $0xb4] sm:$0xf]
      %v1445 = vld [vmem:[%s1398 + $0xb8] sm:$0xf]
      %v1446 = vld [vmem:[%s1398 + $0xbc] sm:$0x1]
      %v1448 = vshrl.u32 %v1399, 16
      %v1450 = vrot.slane %v1448, 4
      %v1451 = vshll.u32 %v1399, 16
      %v1453 = vrot.slane %v1451, 5
      %v1454 = vor.u32 %v1450, %v1453
      %v1455 = vrot.slane %v1454, 4
      %v1457 = vshll.u32 %v1400, 16
      %v1459 = vrot.slane %v1457, 5
      %v1460 = vsel %vm251, %v1455, %v1459
      %v1461 = vshrl.u32 %v1400, 16
      %v1463 = vrot.slane %v1461, 4
      %v1464 = vor.u32 %v1463, %v1459
      %v1465 = vrot.slane %v1464, 4
      %v1467 = vshll.u32 %v1401, 16
      %v1469 = vrot.slane %v1467, 5
      %v1470 = vsel %vm251, %v1465, %v1469
      %v1472 = vshrl.u32 %v1402, 16
      %v1474 = vrot.slane %v1472, 4
      %v1475 = vshll.u32 %v1402, 16
      %v1477 = vrot.slane %v1475, 5
      %v1478 = vor.u32 %v1474, %v1477
      %v1479 = vrot.slane %v1478, 4
      %v1481 = vshll.u32 %v1403, 16
      %v1483 = vrot.slane %v1481, 5
      %v1484 = vsel %vm251, %v1479, %v1483
      %v1485 = vshrl.u32 %v1403, 16
      %v1487 = vrot.slane %v1485, 4
      %v1488 = vor.u32 %v1487, %v1483
      %v1489 = vrot.slane %v1488, 4
      %v1491 = vshll.u32 %v1404, 16
      %v1493 = vrot.slane %v1491, 5
      %v1494 = vsel %vm251, %v1489, %v1493
      %v1496 = vshrl.u32 %v1405, 16
      %v1498 = vrot.slane %v1496, 4
      %v1499 = vshll.u32 %v1405, 16
      %v1501 = vrot.slane %v1499, 5
      %v1502 = vor.u32 %v1498, %v1501
      %v1503 = vrot.slane %v1502, 4
      %v1505 = vshll.u32 %v1406, 16
      %v1507 = vrot.slane %v1505, 5
      %v1508 = vsel %vm251, %v1503, %v1507
      %v1509 = vshrl.u32 %v1406, 16
      %v1511 = vrot.slane %v1509, 4
      %v1512 = vor.u32 %v1511, %v1507
      %v1513 = vrot.slane %v1512, 4
      %v1515 = vshll.u32 %v1407, 16
      %v1517 = vrot.slane %v1515, 5
      %v1518 = vsel %vm251, %v1513, %v1517
      %v1520 = vshrl.u32 %v1408, 16
      %v1522 = vrot.slane %v1520, 4
      %v1523 = vshll.u32 %v1408, 16
      %v1525 = vrot.slane %v1523, 5
      %v1526 = vor.u32 %v1522, %v1525
      %v1527 = vrot.slane %v1526, 4
      %v1529 = vshll.u32 %v1409, 16
      %v1531 = vrot.slane %v1529, 5
      %v1532 = vsel %vm251, %v1527, %v1531
      %v1533 = vshrl.u32 %v1409, 16
      %v1535 = vrot.slane %v1533, 4
      %v1536 = vor.u32 %v1535, %v1531
      %v1537 = vrot.slane %v1536, 4
      %v1539 = vshll.u32 %v1410, 16
      %v1541 = vrot.slane %v1539, 5
      %v1542 = vsel %vm251, %v1537, %v1541
      %v1544 = vshrl.u32 %v1411, 16
      %v1546 = vrot.slane %v1544, 4
      %v1547 = vshll.u32 %v1411, 16
      %v1549 = vrot.slane %v1547, 5
      %v1550 = vor.u32 %v1546, %v1549
      %v1551 = vrot.slane %v1550, 4
      %v1553 = vshll.u32 %v1412, 16
      %v1555 = vrot.slane %v1553, 5
      %v1556 = vsel %vm251, %v1551, %v1555
      %v1557 = vshrl.u32 %v1412, 16
      %v1559 = vrot.slane %v1557, 4
      %v1560 = vor.u32 %v1559, %v1555
      %v1561 = vrot.slane %v1560, 4
      %v1563 = vshll.u32 %v1413, 16
      %v1565 = vrot.slane %v1563, 5
      %v1566 = vsel %vm251, %v1561, %v1565
      %v1568 = vshrl.u32 %v1414, 16
      %v1570 = vrot.slane %v1568, 4
      %v1571 = vshll.u32 %v1414, 16
      %v1573 = vrot.slane %v1571, 5
      %v1574 = vor.u32 %v1570, %v1573
      %v1575 = vrot.slane %v1574, 4
      %v1577 = vshll.u32 %v1415, 16
      %v1579 = vrot.slane %v1577, 5
      %v1580 = vsel %vm251, %v1575, %v1579
      %v1581 = vshrl.u32 %v1415, 16
      %v1583 = vrot.slane %v1581, 4
      %v1584 = vor.u32 %v1583, %v1579
      %v1585 = vrot.slane %v1584, 4
      %v1587 = vshll.u32 %v1416, 16
      %v1589 = vrot.slane %v1587, 5
      %v1590 = vsel %vm251, %v1585, %v1589
      %v1592 = vshrl.u32 %v1417, 16
      %v1594 = vrot.slane %v1592, 4
      %v1595 = vshll.u32 %v1417, 16
      %v1597 = vrot.slane %v1595, 5
      %v1598 = vor.u32 %v1594, %v1597
      %v1599 = vrot.slane %v1598, 4
      %v1601 = vshll.u32 %v1418, 16
      %v1603 = vrot.slane %v1601, 5
      %v1604 = vsel %vm251, %v1599, %v1603
      %v1605 = vshrl.u32 %v1418, 16
      %v1607 = vrot.slane %v1605, 4
      %v1608 = vor.u32 %v1607, %v1603
      %v1609 = vrot.slane %v1608, 4
      %v1611 = vshll.u32 %v1419, 16
      %v1613 = vrot.slane %v1611, 5
      %v1614 = vsel %vm251, %v1609, %v1613
      %v1616 = vshrl.u32 %v1420, 16
      %v1618 = vrot.slane %v1616, 4
      %v1619 = vshll.u32 %v1420, 16
      %v1621 = vrot.slane %v1619, 5
      %v1622 = vor.u32 %v1618, %v1621
      %v1623 = vrot.slane %v1622, 4
      %v1625 = vshll.u32 %v1421, 16
      %v1627 = vrot.slane %v1625, 5
      %v1628 = vsel %vm251, %v1623, %v1627
      %v1629 = vshrl.u32 %v1421, 16
      %v1631 = vrot.slane %v1629, 4
      %v1632 = vor.u32 %v1631, %v1627
      %v1633 = vrot.slane %v1632, 4
      %v1635 = vshll.u32 %v1422, 16
      %v1637 = vrot.slane %v1635, 5
      %v1638 = vsel %vm251, %v1633, %v1637
      %v1640 = vshrl.u32 %v1423, 16
      %v1642 = vrot.slane %v1640, 4
      %v1643 = vshll.u32 %v1423, 16
      %v1645 = vrot.slane %v1643, 5
      %v1646 = vor.u32 %v1642, %v1645
      %v1647 = vrot.slane %v1646, 4
      %v1649 = vshll.u32 %v1424, 16
      %v1651 = vrot.slane %v1649, 5
      %v1652 = vsel %vm251, %v1647, %v1651
      %v1653 = vshrl.u32 %v1424, 16
      %v1655 = vrot.slane %v1653, 4
      %v1656 = vor.u32 %v1655, %v1651
      %v1657 = vrot.slane %v1656, 4
      %v1659 = vshll.u32 %v1425, 16
      %v1661 = vrot.slane %v1659, 5
      %v1662 = vsel %vm251, %v1657, %v1661
      %v1664 = vshrl.u32 %v1426, 16
      %v1666 = vrot.slane %v1664, 4
      %v1667 = vshll.u32 %v1426, 16
      %v1669 = vrot.slane %v1667, 5
      %v1670 = vor.u32 %v1666, %v1669
      %v1671 = vrot.slane %v1670, 4
      %v1673 = vshll.u32 %v1427, 16
      %v1675 = vrot.slane %v1673, 5
      %v1676 = vsel %vm251, %v1671, %v1675
      %v1677 = vshrl.u32 %v1427, 16
      %v1679 = vrot.slane %v1677, 4
      %v1680 = vor.u32 %v1679, %v1675
      %v1681 = vrot.slane %v1680, 4
      %v1683 = vshll.u32 %v1428, 16
      %v1685 = vrot.slane %v1683, 5
      %v1686 = vsel %vm251, %v1681, %v1685
      %v1688 = vshrl.u32 %v1429, 16
      %v1690 = vrot.slane %v1688, 4
      %v1691 = vshll.u32 %v1429, 16
      %v1693 = vrot.slane %v1691, 5
      %v1694 = vor.u32 %v1690, %v1693
      %v1695 = vrot.slane %v1694, 4
      %v1697 = vshll.u32 %v1430, 16
      %v1699 = vrot.slane %v1697, 5
      %v1700 = vsel %vm251, %v1695, %v1699
      %v1701 = vshrl.u32 %v1430, 16
      %v1703 = vrot.slane %v1701, 4
      %v1704 = vor.u32 %v1703, %v1699
      %v1705 = vrot.slane %v1704, 4
      %v1707 = vshll.u32 %v1431, 16
      %v1709 = vrot.slane %v1707, 5
      %v1710 = vsel %vm251, %v1705, %v1709
      %v1712 = vshrl.u32 %v1432, 16
      %v1714 = vrot.slane %v1712, 4
      %v1715 = vshll.u32 %v1432, 16
      %v1717 = vrot.slane %v1715, 5
      %v1718 = vor.u32 %v1714, %v1717
      %v1719 = vrot.slane %v1718, 4
      %v1721 = vshll.u32 %v1433, 16
      %v1723 = vrot.slane %v1721, 5
      %v1724 = vsel %vm251, %v1719, %v1723
      %v1725 = vshrl.u32 %v1433, 16
      %v1727 = vrot.slane %v1725, 4
      %v1728 = vor.u32 %v1727, %v1723
      %v1729 = vrot.slane %v1728, 4
      %v1731 = vshll.u32 %v1434, 16
      %v1733 = vrot.slane %v1731, 5
      %v1734 = vsel %vm251, %v1729, %v1733
      %v1736 = vshrl.u32 %v1435, 16
      %v1738 = vrot.slane %v1736, 4
      %v1739 = vshll.u32 %v1435, 16
      %v1741 = vrot.slane %v1739, 5
      %v1742 = vor.u32 %v1738, %v1741
      %v1743 = vrot.slane %v1742, 4
      %v1745 = vshll.u32 %v1436, 16
      %v1747 = vrot.slane %v1745, 5
      %v1748 = vsel %vm251, %v1743, %v1747
      %v1749 = vshrl.u32 %v1436, 16
      %v1751 = vrot.slane %v1749, 4
      %v1752 = vor.u32 %v1751, %v1747
      %v1753 = vrot.slane %v1752, 4
      %v1755 = vshll.u32 %v1437, 16
      %v1757 = vrot.slane %v1755, 5
      %v1758 = vsel %vm251, %v1753, %v1757
      %v1760 = vshrl.u32 %v1438, 16
      %v1762 = vrot.slane %v1760, 4
      %v1763 = vshll.u32 %v1438, 16
      %v1765 = vrot.slane %v1763, 5
      %v1766 = vor.u32 %v1762, %v1765
      %v1767 = vrot.slane %v1766, 4
      %v1769 = vshll.u32 %v1439, 16
      %v1771 = vrot.slane %v1769, 5
      %v1772 = vsel %vm251, %v1767, %v1771
      %v1773 = vshrl.u32 %v1439, 16
      %v1775 = vrot.slane %v1773, 4
      %v1776 = vor.u32 %v1775, %v1771
      %v1777 = vrot.slane %v1776, 4
      %v1779 = vshll.u32 %v1440, 16
      %v1781 = vrot.slane %v1779, 5
      %v1782 = vsel %vm251, %v1777, %v1781
      %v1784 = vshrl.u32 %v1441, 16
      %v1786 = vrot.slane %v1784, 4
      %v1787 = vshll.u32 %v1441, 16
      %v1789 = vrot.slane %v1787, 5
      %v1790 = vor.u32 %v1786, %v1789
      %v1791 = vrot.slane %v1790, 4
      %v1793 = vshll.u32 %v1442, 16
      %v1795 = vrot.slane %v1793, 5
      %v1796 = vsel %vm251, %v1791, %v1795
      %v1797 = vshrl.u32 %v1442, 16
      %v1799 = vrot.slane %v1797, 4
      %v1800 = vor.u32 %v1799, %v1795
      %v1801 = vrot.slane %v1800, 4
      %v1803 = vshll.u32 %v1443, 16
      %v1805 = vrot.slane %v1803, 5
      %v1806 = vsel %vm251, %v1801, %v1805
      %v1808 = vshrl.u32 %v1444, 16
      %v1810 = vrot.slane %v1808, 4
      %v1811 = vshll.u32 %v1444, 16
      %v1813 = vrot.slane %v1811, 5
      %v1814 = vor.u32 %v1810, %v1813
      %v1815 = vrot.slane %v1814, 4
      %v1817 = vshll.u32 %v1445, 16
      %v1819 = vrot.slane %v1817, 5
      %v1820 = vsel %vm251, %v1815, %v1819
      %v1821 = vshrl.u32 %v1445, 16
      %v1823 = vrot.slane %v1821, 4
      %v1824 = vor.u32 %v1823, %v1819
      %v1825 = vrot.slane %v1824, 4
      %v1827 = vshll.u32 %v1446, 16
      %v1829 = vrot.slane %v1827, 5
      %v1830 = vsel %vm251, %v1825, %v1829
      %v1879 = vrot.slane %v1399, 5
      %v1880 = vrot.slane %v1879, 4
      %v1881 = vrot.slane %v1400, 5
      %v1882 = vsel %vm686, %v1880, %v1881
      %v1883 = vrot.slane %v1881, 4
      %v1884 = vrot.slane %v1401, 5
      %v1885 = vsel %vm686, %v1883, %v1884
      %v1886 = vrot.slane %v1402, 5
      %v1887 = vrot.slane %v1886, 4
      %v1888 = vrot.slane %v1403, 5
      %v1889 = vsel %vm686, %v1887, %v1888
      %v1890 = vrot.slane %v1888, 4
      %v1891 = vrot.slane %v1404, 5
      %v1892 = vsel %vm686, %v1890, %v1891
      %v1893 = vrot.slane %v1405, 5
      %v1894 = vrot.slane %v1893, 4
      %v1895 = vrot.slane %v1406, 5
      %v1896 = vsel %vm686, %v1894, %v1895
      %v1897 = vrot.slane %v1895, 4
      %v1898 = vrot.slane %v1407, 5
      %v1899 = vsel %vm686, %v1897, %v1898
      %v1900 = vrot.slane %v1408, 5
      %v1901 = vrot.slane %v1900, 4
      %v1902 = vrot.slane %v1409, 5
      %v1903 = vsel %vm686, %v1901, %v1902
      %v1904 = vrot.slane %v1902, 4
      %v1905 = vrot.slane %v1410, 5
      %v1906 = vsel %vm686, %v1904, %v1905
      %v1907 = vrot.slane %v1411, 5
      %v1908 = vrot.slane %v1907, 4
      %v1909 = vrot.slane %v1412, 5
      %v1910 = vsel %vm686, %v1908, %v1909
      %v1911 = vrot.slane %v1909, 4
      %v1912 = vrot.slane %v1413, 5
      %v1913 = vsel %vm686, %v1911, %v1912
      %v1914 = vrot.slane %v1414, 5
      %v1915 = vrot.slane %v1914, 4
      %v1916 = vrot.slane %v1415, 5
      %v1917 = vsel %vm686, %v1915, %v1916
      %v1918 = vrot.slane %v1916, 4
      %v1919 = vrot.slane %v1416, 5
      %v1920 = vsel %vm686, %v1918, %v1919
      %v1921 = vrot.slane %v1417, 5
      %v1922 = vrot.slane %v1921, 4
      %v1923 = vrot.slane %v1418, 5
      %v1924 = vsel %vm686, %v1922, %v1923
      %v1925 = vrot.slane %v1923, 4
      %v1926 = vrot.slane %v1419, 5
      %v1927 = vsel %vm686, %v1925, %v1926
      %v1928 = vrot.slane %v1420, 5
      %v1929 = vrot.slane %v1928, 4
      %v1930 = vrot.slane %v1421, 5
      %v1931 = vsel %vm686, %v1929, %v1930
      %v1932 = vrot.slane %v1930, 4
      %v1933 = vrot.slane %v1422, 5
      %v1934 = vsel %vm686, %v1932, %v1933
      %v1935 = vrot.slane %v1423, 5
      %v1936 = vrot.slane %v1935, 4
      %v1937 = vrot.slane %v1424, 5
      %v1938 = vsel %vm686, %v1936, %v1937
      %v1939 = vrot.slane %v1937, 4
      %v1940 = vrot.slane %v1425, 5
      %v1941 = vsel %vm686, %v1939, %v1940
      %v1942 = vrot.slane %v1426, 5
      %v1943 = vrot.slane %v1942, 4
      %v1944 = vrot.slane %v1427, 5
      %v1945 = vsel %vm686, %v1943, %v1944
      %v1946 = vrot.slane %v1944, 4
      %v1947 = vrot.slane %v1428, 5
      %v1948 = vsel %vm686, %v1946, %v1947
      %v1949 = vrot.slane %v1429, 5
      %v1950 = vrot.slane %v1949, 4
      %v1951 = vrot.slane %v1430, 5
      %v1952 = vsel %vm686, %v1950, %v1951
      %v1953 = vrot.slane %v1951, 4
      %v1954 = vrot.slane %v1431, 5
      %v1955 = vsel %vm686, %v1953, %v1954
      %v1956 = vrot.slane %v1432, 5
      %v1957 = vrot.slane %v1956, 4
      %v1958 = vrot.slane %v1433, 5
      %v1959 = vsel %vm686, %v1957, %v1958
      %v1960 = vrot.slane %v1958, 4
      %v1961 = vrot.slane %v1434, 5
      %v1962 = vsel %vm686, %v1960, %v1961
      %v1963 = vrot.slane %v1435, 5
      %v1964 = vrot.slane %v1963, 4
      %v1965 = vrot.slane %v1436, 5
      %v1966 = vsel %vm686, %v1964, %v1965
      %v1967 = vrot.slane %v1965, 4
      %v1968 = vrot.slane %v1437, 5
      %v1969 = vsel %vm686, %v1967, %v1968
      %v1970 = vrot.slane %v1438, 5
      %v1971 = vrot.slane %v1970, 4
      %v1972 = vrot.slane %v1439, 5
      %v1973 = vsel %vm686, %v1971, %v1972
      %v1974 = vrot.slane %v1972, 4
      %v1975 = vrot.slane %v1440, 5
      %v1976 = vsel %vm686, %v1974, %v1975
      %v1977 = vrot.slane %v1441, 5
      %v1978 = vrot.slane %v1977, 4
      %v1979 = vrot.slane %v1442, 5
      %v1980 = vsel %vm686, %v1978, %v1979
      %v1981 = vrot.slane %v1979, 4
      %v1982 = vrot.slane %v1443, 5
      %v1983 = vsel %vm686, %v1981, %v1982
      %v1984 = vrot.slane %v1444, 5
      %v1985 = vrot.slane %v1984, 4
      %v1986 = vrot.slane %v1445, 5
      %v1987 = vsel %vm686, %v1985, %v1986
      %v1988 = vrot.slane %v1986, 4
      %v1989 = vrot.slane %v1446, 5
      %v1990 = vsel %vm686, %v1988, %v1989
      %v1991 = vunpack.c.l.b16 %v201
      %v1992 = vunpack.c.l.b16 %v202
      %v1993 = vunpack.c.l.b16 %v204
      %v1994 = vunpack.c.l.b16 %v205
      %v1995 = vunpack.c.l.b16 %v207
      %v1996 = vunpack.c.l.b16 %v208
      %v1997 = vunpack.c.l.b16 %v210
      %v1998 = vunpack.c.l.b16 %v211
      %v1999 = vunpack.c.l.b16 %v213
      %v2000 = vunpack.c.l.b16 %v214
      %v2001 = vunpack.c.l.b16 %v216
      %v2002 = vunpack.c.l.b16 %v217
      %v2003 = vunpack.c.l.b16 %v219
      %v2004 = vunpack.c.l.b16 %v220
      %v2005 = vunpack.c.l.b16 %v222
      %v2006 = vunpack.c.l.b16 %v223
      %v2007 = vunpack.c.l.b16 %v225
      %v2008 = vunpack.c.l.b16 %v226
      %v2009 = vunpack.c.l.b16 %v228
      %v2010 = vunpack.c.l.b16 %v229
      %v2011 = vunpack.c.l.b16 %v231
      %v2012 = vunpack.c.l.b16 %v232
      %v2013 = vunpack.c.l.b16 %v234
      %v2014 = vunpack.c.l.b16 %v235
      %v2015 = vunpack.c.l.b16 %v237
      %v2016 = vunpack.c.l.b16 %v238
      %v2017 = vunpack.c.l.b16 %v240
      %v2018 = vunpack.c.l.b16 %v241
      %v2019 = vunpack.c.l.b16 %v243
      %v2020 = vunpack.c.l.b16 %v244
      %v2021 = vunpack.c.l.b16 %v246
      %v2022 = vunpack.c.l.b16 %v247
      %v2023 = vpack.c.b16 %v1992, %v1991
      %v2024 = vpack.c.b16 %v1994, %v1993
      %v2025 = vpack.c.b16 %v1996, %v1995
      %v2026 = vpack.c.b16 %v1998, %v1997
      %v2027 = vpack.c.b16 %v2000, %v1999
      %v2028 = vpack.c.b16 %v2002, %v2001
      %v2029 = vpack.c.b16 %v2004, %v2003
      %v2030 = vpack.c.b16 %v2006, %v2005
      %v2031 = vpack.c.b16 %v2008, %v2007
      %v2032 = vpack.c.b16 %v2010, %v2009
      %v2033 = vpack.c.b16 %v2012, %v2011
      %v2034 = vpack.c.b16 %v2014, %v2013
      %v2035 = vpack.c.b16 %v2016, %v2015
      %v2036 = vpack.c.b16 %v2018, %v2017
      %v2037 = vpack.c.b16 %v2020, %v2019
      %v2038 = vpack.c.b16 %v2022, %v2021
      %v2039 = vunpack.c.l.b16 %v265
      %v2040 = vunpack.c.l.b16 %v275
      %v2041 = vunpack.c.l.b16 %v289
      %v2042 = vunpack.c.l.b16 %v299
      %v2043 = vunpack.c.l.b16 %v313
      %v2044 = vunpack.c.l.b16 %v323
      %v2045 = vunpack.c.l.b16 %v337
      %v2046 = vunpack.c.l.b16 %v347
      %v2047 = vunpack.c.l.b16 %v361
      %v2048 = vunpack.c.l.b16 %v371
      %v2049 = vunpack.c.l.b16 %v385
      %v2050 = vunpack.c.l.b16 %v395
      %v2051 = vunpack.c.l.b16 %v409
      %v2052 = vunpack.c.l.b16 %v419
      %v2053 = vunpack.c.l.b16 %v433
      %v2054 = vunpack.c.l.b16 %v443
      %v2055 = vunpack.c.l.b16 %v457
      %v2056 = vunpack.c.l.b16 %v467
      %v2057 = vunpack.c.l.b16 %v481
      %v2058 = vunpack.c.l.b16 %v491
      %v2059 = vunpack.c.l.b16 %v505
      %v2060 = vunpack.c.l.b16 %v515
      %v2061 = vunpack.c.l.b16 %v529
      %v2062 = vunpack.c.l.b16 %v539
      %v2063 = vunpack.c.l.b16 %v553
      %v2064 = vunpack.c.l.b16 %v563
      %v2065 = vunpack.c.l.b16 %v577
      %v2066 = vunpack.c.l.b16 %v587
      %v2067 = vunpack.c.l.b16 %v601
      %v2068 = vunpack.c.l.b16 %v611
      %v2069 = vunpack.c.l.b16 %v625
      %v2070 = vunpack.c.l.b16 %v635
      %v2071 = vpack.c.b16 %v2040, %v2039
      %v2072 = vpack.c.b16 %v2042, %v2041
      %v2073 = vpack.c.b16 %v2044, %v2043
      %v2074 = vpack.c.b16 %v2046, %v2045
      %v2075 = vpack.c.b16 %v2048, %v2047
      %v2076 = vpack.c.b16 %v2050, %v2049
      %v2077 = vpack.c.b16 %v2052, %v2051
      %v2078 = vpack.c.b16 %v2054, %v2053
      %v2079 = vpack.c.b16 %v2056, %v2055
      %v2080 = vpack.c.b16 %v2058, %v2057
      %v2081 = vpack.c.b16 %v2060, %v2059
      %v2082 = vpack.c.b16 %v2062, %v2061
      %v2083 = vpack.c.b16 %v2064, %v2063
      %v2084 = vpack.c.b16 %v2066, %v2065
      %v2085 = vpack.c.b16 %v2068, %v2067
      %v2086 = vpack.c.b16 %v2070, %v2069
      %2087 = vrot.lane.b32.xlu0 %v2071, 4
      %v2088 = vpop.permute.xlu0 %2087
      %2089 = vrot.lane.b32.xlu0 %v2072, 4
      %v2090 = vpop.permute.xlu0 %2089
      %2091 = vrot.lane.b32.xlu0 %v2073, 4
      %v2092 = vpop.permute.xlu0 %2091
      %2093 = vrot.lane.b32.xlu0 %v2074, 4
      %v2094 = vpop.permute.xlu0 %2093
      %2095 = vrot.lane.b32.xlu0 %v2075, 4
      %v2096 = vpop.permute.xlu0 %2095
      %2097 = vrot.lane.b32.xlu0 %v2076, 4
      %v2098 = vpop.permute.xlu0 %2097
      %2099 = vrot.lane.b32.xlu0 %v2077, 4
      %v2100 = vpop.permute.xlu0 %2099
      %2101 = vrot.lane.b32.xlu0 %v2078, 4
      %v2102 = vpop.permute.xlu0 %2101
      %2103 = vrot.lane.b32.xlu0 %v2079, 4
      %v2104 = vpop.permute.xlu0 %2103
      %2105 = vrot.lane.b32.xlu0 %v2080, 4
      %v2106 = vpop.permute.xlu0 %2105
      %2107 = vrot.lane.b32.xlu0 %v2081, 4
      %v2108 = vpop.permute.xlu0 %2107
      %2109 = vrot.lane.b32.xlu0 %v2082, 4
      %v2110 = vpop.permute.xlu0 %2109
      %2111 = vrot.lane.b32.xlu0 %v2083, 4
      %v2112 = vpop.permute.xlu0 %2111
      %2113 = vrot.lane.b32.xlu0 %v2084, 4
      %v2114 = vpop.permute.xlu0 %2113
      %2115 = vrot.lane.b32.xlu0 %v2085, 4
      %v2116 = vpop.permute.xlu0 %2115
      %2117 = vrot.lane.b32.xlu0 %v2086, 4
      %v2118 = vpop.permute.xlu0 %2117
      %v2119 = vunpack.c.l.b16 %v690
      %v2120 = vunpack.c.l.b16 %v693
      %v2121 = vunpack.c.l.b16 %v697
      %v2122 = vunpack.c.l.b16 %v700
      %v2123 = vunpack.c.l.b16 %v704
      %v2124 = vunpack.c.l.b16 %v707
      %v2125 = vunpack.c.l.b16 %v711
      %v2126 = vunpack.c.l.b16 %v714
      %v2127 = vunpack.c.l.b16 %v718
      %v2128 = vunpack.c.l.b16 %v721
      %v2129 = vunpack.c.l.b16 %v725
      %v2130 = vunpack.c.l.b16 %v728
      %v2131 = vunpack.c.l.b16 %v732
      %v2132 = vunpack.c.l.b16 %v735
      %v2133 = vunpack.c.l.b16 %v739
      %v2134 = vunpack.c.l.b16 %v742
      %v2135 = vunpack.c.l.b16 %v746
      %v2136 = vunpack.c.l.b16 %v749
      %v2137 = vunpack.c.l.b16 %v753
      %v2138 = vunpack.c.l.b16 %v756
      %v2139 = vunpack.c.l.b16 %v760
      %v2140 = vunpack.c.l.b16 %v763
      %v2141 = vunpack.c.l.b16 %v767
      %v2142 = vunpack.c.l.b16 %v770
      %v2143 = vunpack.c.l.b16 %v774
      %v2144 = vunpack.c.l.b16 %v777
      %v2145 = vunpack.c.l.b16 %v781
      %v2146 = vunpack.c.l.b16 %v784
      %v2147 = vunpack.c.l.b16 %v788
      %v2148 = vunpack.c.l.b16 %v791
      %v2149 = vunpack.c.l.b16 %v795
      %v2150 = vunpack.c.l.b16 %v798
      %v2151 = vpack.c.b16 %v2120, %v2119
      %v2152 = vpack.c.b16 %v2122, %v2121
      %v2153 = vpack.c.b16 %v2124, %v2123
      %v2154 = vpack.c.b16 %v2126, %v2125
      %v2155 = vpack.c.b16 %v2128, %v2127
      %v2156 = vpack.c.b16 %v2130, %v2129
      %v2157 = vpack.c.b16 %v2132, %v2131
      %v2158 = vpack.c.b16 %v2134, %v2133
      %v2159 = vpack.c.b16 %v2136, %v2135
      %v2160 = vpack.c.b16 %v2138, %v2137
      %v2161 = vpack.c.b16 %v2140, %v2139
      %v2162 = vpack.c.b16 %v2142, %v2141
      %v2163 = vpack.c.b16 %v2144, %v2143
      %v2164 = vpack.c.b16 %v2146, %v2145
      %v2165 = vpack.c.b16 %v2148, %v2147
      %v2166 = vpack.c.b16 %v2150, %v2149
      %2167 = vrot.lane.b32.xlu0 %v2151, 8
      %v2168 = vpop.permute.xlu0 %2167
      %2169 = vrot.lane.b32.xlu0 %v2152, 8
      %v2170 = vpop.permute.xlu0 %2169
      %2171 = vrot.lane.b32.xlu0 %v2153, 8
      %v2172 = vpop.permute.xlu0 %2171
      %2173 = vrot.lane.b32.xlu0 %v2154, 8
      %v2174 = vpop.permute.xlu0 %2173
      %2175 = vrot.lane.b32.xlu0 %v2155, 8
      %v2176 = vpop.permute.xlu0 %2175
      %2177 = vrot.lane.b32.xlu0 %v2156, 8
      %v2178 = vpop.permute.xlu0 %2177
      %2179 = vrot.lane.b32.xlu0 %v2157, 8
      %v2180 = vpop.permute.xlu0 %2179
      %2181 = vrot.lane.b32.xlu0 %v2158, 8
      %v2182 = vpop.permute.xlu0 %2181
      %2183 = vrot.lane.b32.xlu0 %v2159, 8
      %v2184 = vpop.permute.xlu0 %2183
      %2185 = vrot.lane.b32.xlu0 %v2160, 8
      %v2186 = vpop.permute.xlu0 %2185
      %2187 = vrot.lane.b32.xlu0 %v2161, 8
      %v2188 = vpop.permute.xlu0 %2187
      %2189 = vrot.lane.b32.xlu0 %v2162, 8
      %v2190 = vpop.permute.xlu0 %2189
      %2191 = vrot.lane.b32.xlu0 %v2163, 8
      %v2192 = vpop.permute.xlu0 %2191
      %2193 = vrot.lane.b32.xlu0 %v2164, 8
      %v2194 = vpop.permute.xlu0 %2193
      %2195 = vrot.lane.b32.xlu0 %v2165, 8
      %v2196 = vpop.permute.xlu0 %2195
      %2197 = vrot.lane.b32.xlu0 %v2166, 8
      %v2198 = vpop.permute.xlu0 %2197
      %v2199 = vunpack.c.l.b16 %v803
      %v2200 = vunpack.c.l.b16 %v804
      %v2201 = vunpack.c.l.b16 %v806
      %v2202 = vunpack.c.l.b16 %v807
      %v2203 = vunpack.c.l.b16 %v809
      %v2204 = vunpack.c.l.b16 %v810
      %v2205 = vunpack.c.l.b16 %v812
      %v2206 = vunpack.c.l.b16 %v813
      %v2207 = vunpack.c.l.b16 %v815
      %v2208 = vunpack.c.l.b16 %v816
      %v2209 = vunpack.c.l.b16 %v818
      %v2210 = vunpack.c.l.b16 %v819
      %v2211 = vunpack.c.l.b16 %v821
      %v2212 = vunpack.c.l.b16 %v822
      %v2213 = vunpack.c.l.b16 %v824
      %v2214 = vunpack.c.l.b16 %v825
      %v2215 = vunpack.c.l.b16 %v827
      %v2216 = vunpack.c.l.b16 %v828
      %v2217 = vunpack.c.l.b16 %v830
      %v2218 = vunpack.c.l.b16 %v831
      %v2219 = vunpack.c.l.b16 %v833
      %v2220 = vunpack.c.l.b16 %v834
      %v2221 = vunpack.c.l.b16 %v836
      %v2222 = vunpack.c.l.b16 %v837
      %v2223 = vunpack.c.l.b16 %v839
      %v2224 = vunpack.c.l.b16 %v840
      %v2225 = vunpack.c.l.b16 %v842
      %v2226 = vunpack.c.l.b16 %v843
      %v2227 = vunpack.c.l.b16 %v845
      %v2228 = vunpack.c.l.b16 %v846
      %v2229 = vunpack.c.l.b16 %v848
      %v2230 = vunpack.c.l.b16 %v849
      %v2231 = vpack.c.b16 %v2200, %v2199
      %v2232 = vpack.c.b16 %v2202, %v2201
      %v2233 = vpack.c.b16 %v2204, %v2203
      %v2234 = vpack.c.b16 %v2206, %v2205
      %v2235 = vpack.c.b16 %v2208, %v2207
      %v2236 = vpack.c.b16 %v2210, %v2209
      %v2237 = vpack.c.b16 %v2212, %v2211
      %v2238 = vpack.c.b16 %v2214, %v2213
      %v2239 = vpack.c.b16 %v2216, %v2215
      %v2240 = vpack.c.b16 %v2218, %v2217
      %v2241 = vpack.c.b16 %v2220, %v2219
      %v2242 = vpack.c.b16 %v2222, %v2221
      %v2243 = vpack.c.b16 %v2224, %v2223
      %v2244 = vpack.c.b16 %v2226, %v2225
      %v2245 = vpack.c.b16 %v2228, %v2227
      %v2246 = vpack.c.b16 %v2230, %v2229
      %2247 = vrot.lane.b32.xlu0 %v2231, 12
      %v2248 = vpop.permute.xlu0 %2247
      %2249 = vrot.lane.b32.xlu0 %v2232, 12
      %v2250 = vpop.permute.xlu0 %2249
      %2251 = vrot.lane.b32.xlu0 %v2233, 12
      %v2252 = vpop.permute.xlu0 %2251
      %2253 = vrot.lane.b32.xlu0 %v2234, 12
      %v2254 = vpop.permute.xlu0 %2253
      %2255 = vrot.lane.b32.xlu0 %v2235, 12
      %v2256 = vpop.permute.xlu0 %2255
      %2257 = vrot.lane.b32.xlu0 %v2236, 12
      %v2258 = vpop.permute.xlu0 %2257
      %2259 = vrot.lane.b32.xlu0 %v2237, 12
      %v2260 = vpop.permute.xlu0 %2259
      %2261 = vrot.lane.b32.xlu0 %v2238, 12
      %v2262 = vpop.permute.xlu0 %2261
      %2263 = vrot.lane.b32.xlu0 %v2239, 12
      %v2264 = vpop.permute.xlu0 %2263
      %2265 = vrot.lane.b32.xlu0 %v2240, 12
      %v2266 = vpop.permute.xlu0 %2265
      %2267 = vrot.lane.b32.xlu0 %v2241, 12
      %v2268 = vpop.permute.xlu0 %2267
      %2269 = vrot.lane.b32.xlu0 %v2242, 12
      %v2270 = vpop.permute.xlu0 %2269
      %2271 = vrot.lane.b32.xlu0 %v2243, 12
      %v2272 = vpop.permute.xlu0 %2271
      %2273 = vrot.lane.b32.xlu0 %v2244, 12
      %v2274 = vpop.permute.xlu0 %2273
      %2275 = vrot.lane.b32.xlu0 %v2245, 12
      %v2276 = vpop.permute.xlu0 %2275
      %2277 = vrot.lane.b32.xlu0 %v2246, 12
      %v2278 = vpop.permute.xlu0 %2277
      %v2279 = vunpack.c.l.b16 %v864
      %v2280 = vunpack.c.l.b16 %v874
      %v2281 = vunpack.c.l.b16 %v888
      %v2282 = vunpack.c.l.b16 %v898
      %v2283 = vunpack.c.l.b16 %v912
      %v2284 = vunpack.c.l.b16 %v922
      %v2285 = vunpack.c.l.b16 %v936
      %v2286 = vunpack.c.l.b16 %v946
      %v2287 = vunpack.c.l.b16 %v960
      %v2288 = vunpack.c.l.b16 %v970
      %v2289 = vunpack.c.l.b16 %v984
      %v2290 = vunpack.c.l.b16 %v994
      %v2291 = vunpack.c.l.b16 %v1008
      %v2292 = vunpack.c.l.b16 %v1018
      %v2293 = vunpack.c.l.b16 %v1032
      %v2294 = vunpack.c.l.b16 %v1042
      %v2295 = vunpack.c.l.b16 %v1056
      %v2296 = vunpack.c.l.b16 %v1066
      %v2297 = vunpack.c.l.b16 %v1080
      %v2298 = vunpack.c.l.b16 %v1090
      %v2299 = vunpack.c.l.b16 %v1104
      %v2300 = vunpack.c.l.b16 %v1114
      %v2301 = vunpack.c.l.b16 %v1128
      %v2302 = vunpack.c.l.b16 %v1138
      %v2303 = vunpack.c.l.b16 %v1152
      %v2304 = vunpack.c.l.b16 %v1162
      %v2305 = vunpack.c.l.b16 %v1176
      %v2306 = vunpack.c.l.b16 %v1186
      %v2307 = vunpack.c.l.b16 %v1200
      %v2308 = vunpack.c.l.b16 %v1210
      %v2309 = vunpack.c.l.b16 %v1224
      %v2310 = vunpack.c.l.b16 %v1234
      %v2311 = vpack.c.b16 %v2280, %v2279
      %v2312 = vpack.c.b16 %v2282, %v2281
      %v2313 = vpack.c.b16 %v2284, %v2283
      %v2314 = vpack.c.b16 %v2286, %v2285
      %v2315 = vpack.c.b16 %v2288, %v2287
      %v2316 = vpack.c.b16 %v2290, %v2289
      %v2317 = vpack.c.b16 %v2292, %v2291
      %v2318 = vpack.c.b16 %v2294, %v2293
      %v2319 = vpack.c.b16 %v2296, %v2295
      %v2320 = vpack.c.b16 %v2298, %v2297
      %v2321 = vpack.c.b16 %v2300, %v2299
      %v2322 = vpack.c.b16 %v2302, %v2301
      %v2323 = vpack.c.b16 %v2304, %v2303
      %v2324 = vpack.c.b16 %v2306, %v2305
      %v2325 = vpack.c.b16 %v2308, %v2307
      %v2326 = vpack.c.b16 %v2310, %v2309
      %2327 = vrot.lane.b32.xlu0 %v2311, 16
      %v2328 = vpop.permute.xlu0 %2327
      %2329 = vrot.lane.b32.xlu0 %v2312, 16
      %v2330 = vpop.permute.xlu0 %2329
      %2331 = vrot.lane.b32.xlu0 %v2313, 16
      %v2332 = vpop.permute.xlu0 %2331
      %2333 = vrot.lane.b32.xlu0 %v2314, 16
      %v2334 = vpop.permute.xlu0 %2333
      %2335 = vrot.lane.b32.xlu0 %v2315, 16
      %v2336 = vpop.permute.xlu0 %2335
      %2337 = vrot.lane.b32.xlu0 %v2316, 16
      %v2338 = vpop.permute.xlu0 %2337
      %2339 = vrot.lane.b32.xlu0 %v2317, 16
      %v2340 = vpop.permute.xlu0 %2339
      %2341 = vrot.lane.b32.xlu0 %v2318, 16
      %v2342 = vpop.permute.xlu0 %2341
      %2343 = vrot.lane.b32.xlu0 %v2319, 16
      %v2344 = vpop.permute.xlu0 %2343
      %2345 = vrot.lane.b32.xlu0 %v2320, 16
      %v2346 = vpop.permute.xlu0 %2345
      %2347 = vrot.lane.b32.xlu0 %v2321, 16
      %v2348 = vpop.permute.xlu0 %2347
      %2349 = vrot.lane.b32.xlu0 %v2322, 16
      %v2350 = vpop.permute.xlu0 %2349
      %2351 = vrot.lane.b32.xlu0 %v2323, 16
      %v2352 = vpop.permute.xlu0 %2351
      %2353 = vrot.lane.b32.xlu0 %v2324, 16
      %v2354 = vpop.permute.xlu0 %2353
      %2355 = vrot.lane.b32.xlu0 %v2325, 16
      %v2356 = vpop.permute.xlu0 %2355
      %2357 = vrot.lane.b32.xlu0 %v2326, 16
      %v2358 = vpop.permute.xlu0 %2357
      %v2359 = vunpack.c.l.b16 %v1286
      %v2360 = vunpack.c.l.b16 %v1289
      %v2361 = vunpack.c.l.b16 %v1293
      %v2362 = vunpack.c.l.b16 %v1296
      %v2363 = vunpack.c.l.b16 %v1300
      %v2364 = vunpack.c.l.b16 %v1303
      %v2365 = vunpack.c.l.b16 %v1307
      %v2366 = vunpack.c.l.b16 %v1310
      %v2367 = vunpack.c.l.b16 %v1314
      %v2368 = vunpack.c.l.b16 %v1317
      %v2369 = vunpack.c.l.b16 %v1321
      %v2370 = vunpack.c.l.b16 %v1324
      %v2371 = vunpack.c.l.b16 %v1328
      %v2372 = vunpack.c.l.b16 %v1331
      %v2373 = vunpack.c.l.b16 %v1335
      %v2374 = vunpack.c.l.b16 %v1338
      %v2375 = vunpack.c.l.b16 %v1342
      %v2376 = vunpack.c.l.b16 %v1345
      %v2377 = vunpack.c.l.b16 %v1349
      %v2378 = vunpack.c.l.b16 %v1352
      %v2379 = vunpack.c.l.b16 %v1356
      %v2380 = vunpack.c.l.b16 %v1359
      %v2381 = vunpack.c.l.b16 %v1363
      %v2382 = vunpack.c.l.b16 %v1366
      %v2383 = vunpack.c.l.b16 %v1370
      %v2384 = vunpack.c.l.b16 %v1373
      %v2385 = vunpack.c.l.b16 %v1377
      %v2386 = vunpack.c.l.b16 %v1380
      %v2387 = vunpack.c.l.b16 %v1384
      %v2388 = vunpack.c.l.b16 %v1387
      %v2389 = vunpack.c.l.b16 %v1391
      %v2390 = vunpack.c.l.b16 %v1394
      %v2391 = vpack.c.b16 %v2360, %v2359
      %v2392 = vpack.c.b16 %v2362, %v2361
      %v2393 = vpack.c.b16 %v2364, %v2363
      %v2394 = vpack.c.b16 %v2366, %v2365
      %v2395 = vpack.c.b16 %v2368, %v2367
      %v2396 = vpack.c.b16 %v2370, %v2369
      %v2397 = vpack.c.b16 %v2372, %v2371
      %v2398 = vpack.c.b16 %v2374, %v2373
      %v2399 = vpack.c.b16 %v2376, %v2375
      %v2400 = vpack.c.b16 %v2378, %v2377
      %v2401 = vpack.c.b16 %v2380, %v2379
      %v2402 = vpack.c.b16 %v2382, %v2381
      %v2403 = vpack.c.b16 %v2384, %v2383
      %v2404 = vpack.c.b16 %v2386, %v2385
      %v2405 = vpack.c.b16 %v2388, %v2387
      %v2406 = vpack.c.b16 %v2390, %v2389
      %2407 = vrot.lane.b32.xlu0 %v2391, 20
      %v2408 = vpop.permute.xlu0 %2407
      %2409 = vrot.lane.b32.xlu0 %v2392, 20
      %v2410 = vpop.permute.xlu0 %2409
      %2411 = vrot.lane.b32.xlu0 %v2393, 20
      %v2412 = vpop.permute.xlu0 %2411
      %2413 = vrot.lane.b32.xlu0 %v2394, 20
      %v2414 = vpop.permute.xlu0 %2413
      %2415 = vrot.lane.b32.xlu0 %v2395, 20
      %v2416 = vpop.permute.xlu0 %2415
      %2417 = vrot.lane.b32.xlu0 %v2396, 20
      %v2418 = vpop.permute.xlu0 %2417
      %2419 = vrot.lane.b32.xlu0 %v2397, 20
      %v2420 = vpop.permute.xlu0 %2419
      %2421 = vrot.lane.b32.xlu0 %v2398, 20
      %v2422 = vpop.permute.xlu0 %2421
      %2423 = vrot.lane.b32.xlu0 %v2399, 20
      %v2424 = vpop.permute.xlu0 %2423
      %2425 = vrot.lane.b32.xlu0 %v2400, 20
      %v2426 = vpop.permute.xlu0 %2425
      %2427 = vrot.lane.b32.xlu0 %v2401, 20
      %v2428 = vpop.permute.xlu0 %2427
      %2429 = vrot.lane.b32.xlu0 %v2402, 20
      %v2430 = vpop.permute.xlu0 %2429
      %2431 = vrot.lane.b32.xlu0 %v2403, 20
      %v2432 = vpop.permute.xlu0 %2431
      %2433 = vrot.lane.b32.xlu0 %v2404, 20
      %v2434 = vpop.permute.xlu0 %2433
      %2435 = vrot.lane.b32.xlu0 %v2405, 20
      %v2436 = vpop.permute.xlu0 %2435
      %2437 = vrot.lane.b32.xlu0 %v2406, 20
      %v2438 = vpop.permute.xlu0 %2437
      %v2439 = vunpack.c.l.b16 %v1399
      %v2440 = vunpack.c.l.b16 %v1400
      %v2441 = vunpack.c.l.b16 %v1402
      %v2442 = vunpack.c.l.b16 %v1403
      %v2443 = vunpack.c.l.b16 %v1405
      %v2444 = vunpack.c.l.b16 %v1406
      %v2445 = vunpack.c.l.b16 %v1408
      %v2446 = vunpack.c.l.b16 %v1409
      %v2447 = vunpack.c.l.b16 %v1411
      %v2448 = vunpack.c.l.b16 %v1412
      %v2449 = vunpack.c.l.b16 %v1414
      %v2450 = vunpack.c.l.b16 %v1415
      %v2451 = vunpack.c.l.b16 %v1417
      %v2452 = vunpack.c.l.b16 %v1418
      %v2453 = vunpack.c.l.b16 %v1420
      %v2454 = vunpack.c.l.b16 %v1421
      %v2455 = vunpack.c.l.b16 %v1423
      %v2456 = vunpack.c.l.b16 %v1424
      %v2457 = vunpack.c.l.b16 %v1426
      %v2458 = vunpack.c.l.b16 %v1427
      %v2459 = vunpack.c.l.b16 %v1429
      %v2460 = vunpack.c.l.b16 %v1430
      %v2461 = vunpack.c.l.b16 %v1432
      %v2462 = vunpack.c.l.b16 %v1433
      %v2463 = vunpack.c.l.b16 %v1435
      %v2464 = vunpack.c.l.b16 %v1436
      %v2465 = vunpack.c.l.b16 %v1438
      %v2466 = vunpack.c.l.b16 %v1439
      %v2467 = vunpack.c.l.b16 %v1441
      %v2468 = vunpack.c.l.b16 %v1442
      %v2469 = vunpack.c.l.b16 %v1444
      %v2470 = vunpack.c.l.b16 %v1445
      %v2471 = vpack.c.b16 %v2440, %v2439
      %v2472 = vpack.c.b16 %v2442, %v2441
      %v2473 = vpack.c.b16 %v2444, %v2443
      %v2474 = vpack.c.b16 %v2446, %v2445
      %v2475 = vpack.c.b16 %v2448, %v2447
      %v2476 = vpack.c.b16 %v2450, %v2449
      %v2477 = vpack.c.b16 %v2452, %v2451
      %v2478 = vpack.c.b16 %v2454, %v2453
      %v2479 = vpack.c.b16 %v2456, %v2455
      %v2480 = vpack.c.b16 %v2458, %v2457
      %v2481 = vpack.c.b16 %v2460, %v2459
      %v2482 = vpack.c.b16 %v2462, %v2461
      %v2483 = vpack.c.b16 %v2464, %v2463
      %v2484 = vpack.c.b16 %v2466, %v2465
      %v2485 = vpack.c.b16 %v2468, %v2467
      %v2486 = vpack.c.b16 %v2470, %v2469
      %2487 = vrot.lane.b32.xlu0 %v2471, 24
      %v2488 = vpop.permute.xlu0 %2487
      %2489 = vrot.lane.b32.xlu0 %v2472, 24
      %v2490 = vpop.permute.xlu0 %2489
      %2491 = vrot.lane.b32.xlu0 %v2473, 24
      %v2492 = vpop.permute.xlu0 %2491
      %2493 = vrot.lane.b32.xlu0 %v2474, 24
      %v2494 = vpop.permute.xlu0 %2493
      %2495 = vrot.lane.b32.xlu0 %v2475, 24
      %v2496 = vpop.permute.xlu0 %2495
      %2497 = vrot.lane.b32.xlu0 %v2476, 24
      %v2498 = vpop.permute.xlu0 %2497
      %2499 = vrot.lane.b32.xlu0 %v2477, 24
      %v2500 = vpop.permute.xlu0 %2499
      %2501 = vrot.lane.b32.xlu0 %v2478, 24
      %v2502 = vpop.permute.xlu0 %2501
      %2503 = vrot.lane.b32.xlu0 %v2479, 24
      %v2504 = vpop.permute.xlu0 %2503
      %2505 = vrot.lane.b32.xlu0 %v2480, 24
      %v2506 = vpop.permute.xlu0 %2505
      %2507 = vrot.lane.b32.xlu0 %v2481, 24
      %v2508 = vpop.permute.xlu0 %2507
      %2509 = vrot.lane.b32.xlu0 %v2482, 24
      %v2510 = vpop.permute.xlu0 %2509
      %2511 = vrot.lane.b32.xlu0 %v2483, 24
      %v2512 = vpop.permute.xlu0 %2511
      %2513 = vrot.lane.b32.xlu0 %v2484, 24
      %v2514 = vpop.permute.xlu0 %2513
      %2515 = vrot.lane.b32.xlu0 %v2485, 24
      %v2516 = vpop.permute.xlu0 %2515
      %2517 = vrot.lane.b32.xlu0 %v2486, 24
      %v2518 = vpop.permute.xlu0 %2517
      %v2519 = vunpack.c.l.b16 %v1460
      %v2520 = vunpack.c.l.b16 %v1470
      %v2521 = vunpack.c.l.b16 %v1484
      %v2522 = vunpack.c.l.b16 %v1494
      %v2523 = vunpack.c.l.b16 %v1508
      %v2524 = vunpack.c.l.b16 %v1518
      %v2525 = vunpack.c.l.b16 %v1532
      %v2526 = vunpack.c.l.b16 %v1542
      %v2527 = vunpack.c.l.b16 %v1556
      %v2528 = vunpack.c.l.b16 %v1566
      %v2529 = vunpack.c.l.b16 %v1580
      %v2530 = vunpack.c.l.b16 %v1590
      %v2531 = vunpack.c.l.b16 %v1604
      %v2532 = vunpack.c.l.b16 %v1614
      %v2533 = vunpack.c.l.b16 %v1628
      %v2534 = vunpack.c.l.b16 %v1638
      %v2535 = vunpack.c.l.b16 %v1652
      %v2536 = vunpack.c.l.b16 %v1662
      %v2537 = vunpack.c.l.b16 %v1676
      %v2538 = vunpack.c.l.b16 %v1686
      %v2539 = vunpack.c.l.b16 %v1700
      %v2540 = vunpack.c.l.b16 %v1710
      %v2541 = vunpack.c.l.b16 %v1724
      %v2542 = vunpack.c.l.b16 %v1734
      %v2543 = vunpack.c.l.b16 %v1748
      %v2544 = vunpack.c.l.b16 %v1758
      %v2545 = vunpack.c.l.b16 %v1772
      %v2546 = vunpack.c.l.b16 %v1782
      %v2547 = vunpack.c.l.b16 %v1796
      %v2548 = vunpack.c.l.b16 %v1806
      %v2549 = vunpack.c.l.b16 %v1820
      %v2550 = vunpack.c.l.b16 %v1830
      %v2551 = vpack.c.b16 %v2520, %v2519
      %v2552 = vpack.c.b16 %v2522, %v2521
      %v2553 = vpack.c.b16 %v2524, %v2523
      %v2554 = vpack.c.b16 %v2526, %v2525
      %v2555 = vpack.c.b16 %v2528, %v2527
      %v2556 = vpack.c.b16 %v2530, %v2529
      %v2557 = vpack.c.b16 %v2532, %v2531
      %v2558 = vpack.c.b16 %v2534, %v2533
      %v2559 = vpack.c.b16 %v2536, %v2535
      %v2560 = vpack.c.b16 %v2538, %v2537
      %v2561 = vpack.c.b16 %v2540, %v2539
      %v2562 = vpack.c.b16 %v2542, %v2541
      %v2563 = vpack.c.b16 %v2544, %v2543
      %v2564 = vpack.c.b16 %v2546, %v2545
      %v2565 = vpack.c.b16 %v2548, %v2547
      %v2566 = vpack.c.b16 %v2550, %v2549
      %2567 = vrot.lane.b32.xlu0 %v2551, 28
      %v2568 = vpop.permute.xlu0 %2567
      %2569 = vrot.lane.b32.xlu0 %v2552, 28
      %v2570 = vpop.permute.xlu0 %2569
      %2571 = vrot.lane.b32.xlu0 %v2553, 28
      %v2572 = vpop.permute.xlu0 %2571
      %2573 = vrot.lane.b32.xlu0 %v2554, 28
      %v2574 = vpop.permute.xlu0 %2573
      %2575 = vrot.lane.b32.xlu0 %v2555, 28
      %v2576 = vpop.permute.xlu0 %2575
      %2577 = vrot.lane.b32.xlu0 %v2556, 28
      %v2578 = vpop.permute.xlu0 %2577
      %2579 = vrot.lane.b32.xlu0 %v2557, 28
      %v2580 = vpop.permute.xlu0 %2579
      %2581 = vrot.lane.b32.xlu0 %v2558, 28
      %v2582 = vpop.permute.xlu0 %2581
      %2583 = vrot.lane.b32.xlu0 %v2559, 28
      %v2584 = vpop.permute.xlu0 %2583
      %2585 = vrot.lane.b32.xlu0 %v2560, 28
      %v2586 = vpop.permute.xlu0 %2585
      %2587 = vrot.lane.b32.xlu0 %v2561, 28
      %v2588 = vpop.permute.xlu0 %2587
      %2589 = vrot.lane.b32.xlu0 %v2562, 28
      %v2590 = vpop.permute.xlu0 %2589
      %2591 = vrot.lane.b32.xlu0 %v2563, 28
      %v2592 = vpop.permute.xlu0 %2591
      %2593 = vrot.lane.b32.xlu0 %v2564, 28
      %v2594 = vpop.permute.xlu0 %2593
      %2595 = vrot.lane.b32.xlu0 %v2565, 28
      %v2596 = vpop.permute.xlu0 %2595
      %2597 = vrot.lane.b32.xlu0 %v2566, 28
      %v2598 = vpop.permute.xlu0 %2597
      %v2599 = vunpack.c.l.b16 %v1882
      %v2600 = vunpack.c.l.b16 %v1885
      %v2601 = vunpack.c.l.b16 %v1889
      %v2602 = vunpack.c.l.b16 %v1892
      %v2603 = vunpack.c.l.b16 %v1896
      %v2604 = vunpack.c.l.b16 %v1899
      %v2605 = vunpack.c.l.b16 %v1903
      %v2606 = vunpack.c.l.b16 %v1906
      %v2607 = vunpack.c.l.b16 %v1910
      %v2608 = vunpack.c.l.b16 %v1913
      %v2609 = vunpack.c.l.b16 %v1917
      %v2610 = vunpack.c.l.b16 %v1920
      %v2611 = vunpack.c.l.b16 %v1924
      %v2612 = vunpack.c.l.b16 %v1927
      %v2613 = vunpack.c.l.b16 %v1931
      %v2614 = vunpack.c.l.b16 %v1934
      %v2615 = vunpack.c.l.b16 %v1938
      %v2616 = vunpack.c.l.b16 %v1941
      %v2617 = vunpack.c.l.b16 %v1945
      %v2618 = vunpack.c.l.b16 %v1948
      %v2619 = vunpack.c.l.b16 %v1952
      %v2620 = vunpack.c.l.b16 %v1955
      %v2621 = vunpack.c.l.b16 %v1959
      %v2622 = vunpack.c.l.b16 %v1962
      %v2623 = vunpack.c.l.b16 %v1966
      %v2624 = vunpack.c.l.b16 %v1969
      %v2625 = vunpack.c.l.b16 %v1973
      %v2626 = vunpack.c.l.b16 %v1976
      %v2627 = vunpack.c.l.b16 %v1980
      %v2628 = vunpack.c.l.b16 %v1983
      %v2629 = vunpack.c.l.b16 %v1987
      %v2630 = vunpack.c.l.b16 %v1990
      %v2631 = vpack.c.b16 %v2600, %v2599
      %v2632 = vpack.c.b16 %v2602, %v2601
      %v2633 = vpack.c.b16 %v2604, %v2603
      %v2634 = vpack.c.b16 %v2606, %v2605
      %v2635 = vpack.c.b16 %v2608, %v2607
      %v2636 = vpack.c.b16 %v2610, %v2609
      %v2637 = vpack.c.b16 %v2612, %v2611
      %v2638 = vpack.c.b16 %v2614, %v2613
      %v2639 = vpack.c.b16 %v2616, %v2615
      %v2640 = vpack.c.b16 %v2618, %v2617
      %v2641 = vpack.c.b16 %v2620, %v2619
      %v2642 = vpack.c.b16 %v2622, %v2621
      %v2643 = vpack.c.b16 %v2624, %v2623
      %v2644 = vpack.c.b16 %v2626, %v2625
      %v2645 = vpack.c.b16 %v2628, %v2627
      %v2646 = vpack.c.b16 %v2630, %v2629
      %2647 = vrot.lane.b32.xlu0 %v2631, 32
      %v2648 = vpop.permute.xlu0 %2647
      %2649 = vrot.lane.b32.xlu0 %v2632, 32
      %v2650 = vpop.permute.xlu0 %2649
      %2651 = vrot.lane.b32.xlu0 %v2633, 32
      %v2652 = vpop.permute.xlu0 %2651
      %2653 = vrot.lane.b32.xlu0 %v2634, 32
      %v2654 = vpop.permute.xlu0 %2653
      %2655 = vrot.lane.b32.xlu0 %v2635, 32
      %v2656 = vpop.permute.xlu0 %2655
      %2657 = vrot.lane.b32.xlu0 %v2636, 32
      %v2658 = vpop.permute.xlu0 %2657
      %2659 = vrot.lane.b32.xlu0 %v2637, 32
      %v2660 = vpop.permute.xlu0 %2659
      %2661 = vrot.lane.b32.xlu0 %v2638, 32
      %v2662 = vpop.permute.xlu0 %2661
      %2663 = vrot.lane.b32.xlu0 %v2639, 32
      %v2664 = vpop.permute.xlu0 %2663
      %2665 = vrot.lane.b32.xlu0 %v2640, 32
      %v2666 = vpop.permute.xlu0 %2665
      %2667 = vrot.lane.b32.xlu0 %v2641, 32
      %v2668 = vpop.permute.xlu0 %2667
      %2669 = vrot.lane.b32.xlu0 %v2642, 32
      %v2670 = vpop.permute.xlu0 %2669
      %2671 = vrot.lane.b32.xlu0 %v2643, 32
      %v2672 = vpop.permute.xlu0 %2671
      %2673 = vrot.lane.b32.xlu0 %v2644, 32
      %v2674 = vpop.permute.xlu0 %2673
      %2675 = vrot.lane.b32.xlu0 %v2645, 32
      %v2676 = vpop.permute.xlu0 %2675
      %2677 = vrot.lane.b32.xlu0 %v2646, 32
      %v2678 = vpop.permute.xlu0 %2677
      %vm2679 = vcmask 31744
      %v2682 = vsel %vm2679, %v2023, %v2088
      %v2685 = vsel %vm2679, %v2024, %v2090
      %v2688 = vsel %vm2679, %v2025, %v2092
      %v2691 = vsel %vm2679, %v2026, %v2094
      %v2694 = vsel %vm2679, %v2027, %v2096
      %v2697 = vsel %vm2679, %v2028, %v2098
      %v2700 = vsel %vm2679, %v2029, %v2100
      %v2703 = vsel %vm2679, %v2030, %v2102
      %v2706 = vsel %vm2679, %v2031, %v2104
      %v2709 = vsel %vm2679, %v2032, %v2106
      %v2712 = vsel %vm2679, %v2033, %v2108
      %v2715 = vsel %vm2679, %v2034, %v2110
      %v2718 = vsel %vm2679, %v2035, %v2112
      %v2721 = vsel %vm2679, %v2036, %v2114
      %v2724 = vsel %vm2679, %v2037, %v2116
      %v2727 = vsel %vm2679, %v2038, %v2118
      %vm2728 = vcmask 64512
      %v2730 = vsel %vm2728, %v2682, %v2168
      %v2732 = vsel %vm2728, %v2685, %v2170
      %v2734 = vsel %vm2728, %v2688, %v2172
      %v2736 = vsel %vm2728, %v2691, %v2174
      %v2738 = vsel %vm2728, %v2694, %v2176
      %v2740 = vsel %vm2728, %v2697, %v2178
      %v2742 = vsel %vm2728, %v2700, %v2180
      %v2744 = vsel %vm2728, %v2703, %v2182
      %v2746 = vsel %vm2728, %v2706, %v2184
      %v2748 = vsel %vm2728, %v2709, %v2186
      %v2750 = vsel %vm2728, %v2712, %v2188
      %v2752 = vsel %vm2728, %v2715, %v2190
      %v2754 = vsel %vm2728, %v2718, %v2192
      %v2756 = vsel %vm2728, %v2721, %v2194
      %v2758 = vsel %vm2728, %v2724, %v2196
      %v2760 = vsel %vm2728, %v2727, %v2198
      %vm2761 = vcmask 97280
      %v2763 = vsel %vm2761, %v2730, %v2248
      %v2765 = vsel %vm2761, %v2732, %v2250
      %v2767 = vsel %vm2761, %v2734, %v2252
      %v2769 = vsel %vm2761, %v2736, %v2254
      %v2771 = vsel %vm2761, %v2738, %v2256
      %v2773 = vsel %vm2761, %v2740, %v2258
      %v2775 = vsel %vm2761, %v2742, %v2260
      %v2777 = vsel %vm2761, %v2744, %v2262
      %v2779 = vsel %vm2761, %v2746, %v2264
      %v2781 = vsel %vm2761, %v2748, %v2266
      %v2783 = vsel %vm2761, %v2750, %v2268
      %v2785 = vsel %vm2761, %v2752, %v2270
      %v2787 = vsel %vm2761, %v2754, %v2272
      %v2789 = vsel %vm2761, %v2756, %v2274
      %v2791 = vsel %vm2761, %v2758, %v2276
      %v2793 = vsel %vm2761, %v2760, %v2278
      %vm2794 = vcmask 130048
      %v2796 = vsel %vm2794, %v2763, %v2328
      %v2798 = vsel %vm2794, %v2765, %v2330
      %v2800 = vsel %vm2794, %v2767, %v2332
      %v2802 = vsel %vm2794, %v2769, %v2334
      %v2804 = vsel %vm2794, %v2771, %v2336
      %v2806 = vsel %vm2794, %v2773, %v2338
      %v2808 = vsel %vm2794, %v2775, %v2340
      %v2810 = vsel %vm2794, %v2777, %v2342
      %v2812 = vsel %vm2794, %v2779, %v2344
      %v2814 = vsel %vm2794, %v2781, %v2346
      %v2816 = vsel %vm2794, %v2783, %v2348
      %v2818 = vsel %vm2794, %v2785, %v2350
      %v2820 = vsel %vm2794, %v2787, %v2352
      %v2822 = vsel %vm2794, %v2789, %v2354
      %v2824 = vsel %vm2794, %v2791, %v2356
      %v2826 = vsel %vm2794, %v2793, %v2358
      %vm2827 = vcmask 162816
      %v2829 = vsel %vm2827, %v2796, %v2408
      %v2831 = vsel %vm2827, %v2798, %v2410
      %v2833 = vsel %vm2827, %v2800, %v2412
      %v2835 = vsel %vm2827, %v2802, %v2414
      %v2837 = vsel %vm2827, %v2804, %v2416
      %v2839 = vsel %vm2827, %v2806, %v2418
      %v2841 = vsel %vm2827, %v2808, %v2420
      %v2843 = vsel %vm2827, %v2810, %v2422
      %v2845 = vsel %vm2827, %v2812, %v2424
      %v2847 = vsel %vm2827, %v2814, %v2426
      %v2849 = vsel %vm2827, %v2816, %v2428
      %v2851 = vsel %vm2827, %v2818, %v2430
      %v2853 = vsel %vm2827, %v2820, %v2432
      %v2855 = vsel %vm2827, %v2822, %v2434
      %v2857 = vsel %vm2827, %v2824, %v2436
      %v2859 = vsel %vm2827, %v2826, %v2438
      %vm2860 = vcmask 195584
      %v2862 = vsel %vm2860, %v2829, %v2488
      %v2864 = vsel %vm2860, %v2831, %v2490
      %v2866 = vsel %vm2860, %v2833, %v2492
      %v2868 = vsel %vm2860, %v2835, %v2494
      %v2870 = vsel %vm2860, %v2837, %v2496
      %v2872 = vsel %vm2860, %v2839, %v2498
      %v2874 = vsel %vm2860, %v2841, %v2500
      %v2876 = vsel %vm2860, %v2843, %v2502
      %v2878 = vsel %vm2860, %v2845, %v2504
      %v2880 = vsel %vm2860, %v2847, %v2506
      %v2882 = vsel %vm2860, %v2849, %v2508
      %v2884 = vsel %vm2860, %v2851, %v2510
      %v2886 = vsel %vm2860, %v2853, %v2512
      %v2888 = vsel %vm2860, %v2855, %v2514
      %v2890 = vsel %vm2860, %v2857, %v2516
      %v2892 = vsel %vm2860, %v2859, %v2518
      %vm2893 = vcmask 228352
      %v2895 = vsel %vm2893, %v2862, %v2568
      %v2897 = vsel %vm2893, %v2864, %v2570
      %v2899 = vsel %vm2893, %v2866, %v2572
      %v2901 = vsel %vm2893, %v2868, %v2574
      %v2903 = vsel %vm2893, %v2870, %v2576
      %v2905 = vsel %vm2893, %v2872, %v2578
      %v2907 = vsel %vm2893, %v2874, %v2580
      %v2909 = vsel %vm2893, %v2876, %v2582
      %v2911 = vsel %vm2893, %v2878, %v2584
      %v2913 = vsel %vm2893, %v2880, %v2586
      %v2915 = vsel %vm2893, %v2882, %v2588
      %v2917 = vsel %vm2893, %v2884, %v2590
      %v2919 = vsel %vm2893, %v2886, %v2592
      %v2921 = vsel %vm2893, %v2888, %v2594
      %v2923 = vsel %vm2893, %v2890, %v2596
      %v2925 = vsel %vm2893, %v2892, %v2598
      %vm2926 = vcmask 261120
      %v2928 = vsel %vm2926, %v2895, %v2648
      %v2930 = vsel %vm2926, %v2897, %v2650
      %v2932 = vsel %vm2926, %v2899, %v2652
      %v2934 = vsel %vm2926, %v2901, %v2654
      %v2936 = vsel %vm2926, %v2903, %v2656
      %v2938 = vsel %vm2926, %v2905, %v2658
      %v2940 = vsel %vm2926, %v2907, %v2660
      %v2942 = vsel %vm2926, %v2909, %v2662
      %v2944 = vsel %vm2926, %v2911, %v2664
      %v2946 = vsel %vm2926, %v2913, %v2666
      %v2948 = vsel %vm2926, %v2915, %v2668
      %v2950 = vsel %vm2926, %v2917, %v2670
      %v2952 = vsel %vm2926, %v2919, %v2672
      %v2954 = vsel %vm2926, %v2921, %v2674
      %v2956 = vsel %vm2926, %v2923, %v2676
      %v2958 = vsel %vm2926, %v2925, %v2678
      %v2959 = vld [vmem:[%s1] sm:$0xf]
      %v2960 = vld [vmem:[%s1 + $0x4] sm:$0xf]
      %v2961 = vld [vmem:[%s1 + $0x8] sm:$0xf]
      %v2962 = vld [vmem:[%s1 + $0xc] sm:$0xf]
      %v2963 = vld [vmem:[%s1 + $0x10] sm:$0x3]
      %v2964 = vld [vmem:[%s2] sm:$0x1]
      %v2966 = vlaneseq
      %v2967 = vshrl.u32 %v2966, 7
      %v2968 = vsub.s32 0, %v2967
      %v2969 = vrot.slane %v2964, %v2968
      %v2976 = vunpack.c.l.b16 %v2959
      %v2977 = vunpack.c.l.b16 %v2960
      %v2978 = vunpack.c.l.b16 %v2961
      %v2979 = vunpack.c.l.b16 %v2962
      %v2980 = vunpack.c.l.b16 %v2963
      %v2981 = vpack.c.b16 %v2977, %v2976
      %v2982 = vpack.c.b16 %v2979, %v2978
      %v2983 = vpack.c.b16 %v2980, %v2980
      %vm2986 = vcmask 293888
      %v2987 = vsel %vm2986, %v2928, 0
      %v2989 = vsel %vm2986, %v2930, 0
      %v2991 = vsel %vm2986, %v2932, 0
      %v2993 = vsel %vm2986, %v2934, 0
      %v2995 = vsel %vm2986, %v2936, 0
      %v2997 = vsel %vm2986, %v2938, 0
      %v2999 = vsel %vm2986, %v2940, 0
      %v3001 = vsel %vm2986, %v2942, 0
      %v3003 = vsel %vm2986, %v2944, 0
      %v3005 = vsel %vm2986, %v2946, 0
      %v3007 = vsel %vm2986, %v2948, 0
      %v3009 = vsel %vm2986, %v2950, 0
      %v3011 = vsel %vm2986, %v2952, 0
      %v3013 = vsel %vm2986, %v2954, 0
      %v3015 = vsel %vm2986, %v2956, 0
      %v3017 = vsel %vm2986, %v2958, 0
      %vm3019 = vcmask 1041408
      %v3021 = vsel %vm3019, %v2983, 0
      %3023 = vmatprep.subr.bf16.mxu0 0
      %3024 = vmatpush1.bf16.msra.mxu0 0
      %3025 = vmatprep.subr.bf16.mxu0 0
      %3026 = vmatpush1.bf16.msra.mxu0 0
      %3027 = vmatprep.subr.bf16.mxu0 0
      %3028 = vmatpush1.bf16.msra.mxu0 0
      %3029 = vmatprep.subr.bf16.mxu0 0
      %3030 = vmatpush1.bf16.msra.mxu0 0
      %3031 = vmatprep.subr.bf16.mxu0 0
      %3032 = vmatpush1.bf16.msra.mxu0 0
      %3033 = vmatprep.subr.bf16.mxu0 0
      %3034 = vmatpush1.bf16.msra.mxu0 %v3021
      %3035 = vmatprep.subr.bf16.mxu0 0
      %3036 = vmatpush1.bf16.msra.mxu0 %v2982
      %3037 = vmatprep.subr.bf16.mxu0 0
      %3038 = vmatpush1.bf16.msra.mxu0 %v2981
      %3039 = vmatprep.subr.bf16.mxu0 0
      %3040 = vmatpush2.bf16.msra.mxu0 0
      %3041 = vmatprep.subr.bf16.mxu0 0
      %3042 = vmatpush2.bf16.msra.mxu0 0
      %3043 = vmatprep.subr.bf16.mxu0 0
      %3044 = vmatpush2.bf16.msra.mxu0 0
      %3045 = vmatprep.subr.bf16.mxu0 0
      %3046 = vmatpush2.bf16.msra.mxu0 0
      %3047 = vmatprep.subr.bf16.mxu0 0
      %3048 = vmatpush2.bf16.msra.mxu0 0
      %3049 = vmatprep.subr.bf16.mxu0 0
      %3050 = vmatpush2.bf16.msra.mxu0 0
      %3051 = vmatprep.subr.bf16.mxu0 0
      %3052 = vmatpush2.bf16.msra.mxu0 0
      %3053 = vmatprep.subr.bf16.mxu0 0
      %3054 = vmatpush2.bf16.msra.mxu0 0
      %3055 = vmatprep.mubr.bf16.mxu0 0
      %3056 = vmatmul.mubr.bf16.gmra.mxu0 %v2987
      %v3057 = vpop.f32.mrf.mxu0
      %v3058 = vadd.f32 %v2969, %v3057
      %v3059 = vpop.f32.mrf.mxu0
      %v3060 = vpop.f32.mrf.mxu0
      %v3061 = vadd.f32 %v2969, %v3060
      %v3062 = vpop.f32.mrf.mxu0
      %3063 = vmatprep.mubr.bf16.mxu0 0
      %3064 = vmatmul.mubr.bf16.gmra.mxu0 %v2989
      %v3065 = vpop.f32.mrf.mxu0
      %v3066 = vadd.f32 %v2969, %v3065
      %v3067 = vpop.f32.mrf.mxu0
      %v3068 = vpop.f32.mrf.mxu0
      %v3069 = vadd.f32 %v2969, %v3068
      %v3070 = vpop.f32.mrf.mxu0
      %3071 = vmatprep.mubr.bf16.mxu0 0
      %3072 = vmatmul.mubr.bf16.gmra.mxu0 %v2991
      %v3073 = vpop.f32.mrf.mxu0
      %v3074 = vadd.f32 %v2969, %v3073
      %v3075 = vpop.f32.mrf.mxu0
      %v3076 = vpop.f32.mrf.mxu0
      %v3077 = vadd.f32 %v2969, %v3076
      %v3078 = vpop.f32.mrf.mxu0
      %3079 = vmatprep.mubr.bf16.mxu0 0
      %3080 = vmatmul.mubr.bf16.gmra.mxu0 %v2993
      %v3081 = vpop.f32.mrf.mxu0
      %v3082 = vadd.f32 %v2969, %v3081
      %v3083 = vpop.f32.mrf.mxu0
      %v3084 = vpop.f32.mrf.mxu0
      %v3085 = vadd.f32 %v2969, %v3084
      %v3086 = vpop.f32.mrf.mxu0
      %3087 = vmatprep.mubr.bf16.mxu0 0
      %3088 = vmatmul.mubr.bf16.gmra.mxu0 %v2995
      %v3089 = vpop.f32.mrf.mxu0
      %v3090 = vadd.f32 %v2969, %v3089
      %v3091 = vpop.f32.mrf.mxu0
      %v3092 = vpop.f32.mrf.mxu0
      %v3093 = vadd.f32 %v2969, %v3092
      %v3094 = vpop.f32.mrf.mxu0
      %3095 = vmatprep.mubr.bf16.mxu0 0
      %3096 = vmatmul.mubr.bf16.gmra.mxu0 %v2997
      %v3097 = vpop.f32.mrf.mxu0
      %v3098 = vadd.f32 %v2969, %v3097
      %v3099 = vpop.f32.mrf.mxu0
      %v3100 = vpop.f32.mrf.mxu0
      %v3101 = vadd.f32 %v2969, %v3100
      %v3102 = vpop.f32.mrf.mxu0
      %3103 = vmatprep.mubr.bf16.mxu0 0
      %3104 = vmatmul.mubr.bf16.gmra.mxu0 %v2999
      %v3105 = vpop.f32.mrf.mxu0
      %v3106 = vadd.f32 %v2969, %v3105
      %v3107 = vpop.f32.mrf.mxu0
      %v3108 = vpop.f32.mrf.mxu0
      %v3109 = vadd.f32 %v2969, %v3108
      %v3110 = vpop.f32.mrf.mxu0
      %3111 = vmatprep.mubr.bf16.mxu0 0
      %3112 = vmatmul.mubr.bf16.gmra.mxu0 %v3001
      %v3113 = vpop.f32.mrf.mxu0
      %v3114 = vadd.f32 %v2969, %v3113
      %v3115 = vpop.f32.mrf.mxu0
      %v3116 = vpop.f32.mrf.mxu0
      %v3117 = vadd.f32 %v2969, %v3116
      %v3118 = vpop.f32.mrf.mxu0
      %3119 = vmatprep.mubr.bf16.mxu0 0
      %3120 = vmatmul.mubr.bf16.gmra.mxu0 %v3003
      %v3121 = vpop.f32.mrf.mxu0
      %v3122 = vadd.f32 %v2969, %v3121
      %v3123 = vpop.f32.mrf.mxu0
      %v3124 = vpop.f32.mrf.mxu0
      %v3125 = vadd.f32 %v2969, %v3124
      %v3126 = vpop.f32.mrf.mxu0
      %3127 = vmatprep.mubr.bf16.mxu0 0
      %3128 = vmatmul.mubr.bf16.gmra.mxu0 %v3005
      %v3129 = vpop.f32.mrf.mxu0
      %v3130 = vadd.f32 %v2969, %v3129
      %v3131 = vpop.f32.mrf.mxu0
      %v3132 = vpop.f32.mrf.mxu0
      %v3133 = vadd.f32 %v2969, %v3132
      %v3134 = vpop.f32.mrf.mxu0
      %3135 = vmatprep.mubr.bf16.mxu0 0
      %3136 = vmatmul.mubr.bf16.gmra.mxu0 %v3007
      %v3137 = vpop.f32.mrf.mxu0
      %v3138 = vadd.f32 %v2969, %v3137
      %v3139 = vpop.f32.mrf.mxu0
      %v3140 = vpop.f32.mrf.mxu0
      %v3141 = vadd.f32 %v2969, %v3140
      %v3142 = vpop.f32.mrf.mxu0
      %3143 = vmatprep.mubr.bf16.mxu0 0
      %3144 = vmatmul.mubr.bf16.gmra.mxu0 %v3009
      %v3145 = vpop.f32.mrf.mxu0
      %v3146 = vadd.f32 %v2969, %v3145
      %v3147 = vpop.f32.mrf.mxu0
      %v3148 = vpop.f32.mrf.mxu0
      %v3149 = vadd.f32 %v2969, %v3148
      %v3150 = vpop.f32.mrf.mxu0
      %3151 = vmatprep.mubr.bf16.mxu0 0
      %3152 = vmatmul.mubr.bf16.gmra.mxu0 %v3011
      %v3153 = vpop.f32.mrf.mxu0
      %v3154 = vadd.f32 %v2969, %v3153
      %v3155 = vpop.f32.mrf.mxu0
      %v3156 = vpop.f32.mrf.mxu0
      %v3157 = vadd.f32 %v2969, %v3156
      %v3158 = vpop.f32.mrf.mxu0
      %3159 = vmatprep.mubr.bf16.mxu0 0
      %3160 = vmatmul.mubr.bf16.gmra.mxu0 %v3013
      %v3161 = vpop.f32.mrf.mxu0
      %v3162 = vadd.f32 %v2969, %v3161
      %v3163 = vpop.f32.mrf.mxu0
      %v3164 = vpop.f32.mrf.mxu0
      %v3165 = vadd.f32 %v2969, %v3164
      %v3166 = vpop.f32.mrf.mxu0
      %3167 = vmatprep.mubr.bf16.mxu0 0
      %3168 = vmatmul.mubr.bf16.gmra.mxu0 %v3015
      %v3169 = vpop.f32.mrf.mxu0
      %v3170 = vadd.f32 %v2969, %v3169
      %v3171 = vpop.f32.mrf.mxu0
      %v3172 = vpop.f32.mrf.mxu0
      %v3173 = vadd.f32 %v2969, %v3172
      %v3174 = vpop.f32.mrf.mxu0
      %3175 = vmatprep.mubr.bf16.mxu0 0
      %3176 = vmatmul.mubr.bf16.gmra.mxu0 %v3017
      %v3177 = vpop.f32.mrf.mxu0
      %v3178 = vadd.f32 %v2969, %v3177
      %v3179 = vpop.f32.mrf.mxu0
      %v3180 = vpop.f32.mrf.mxu0
      %v3181 = vadd.f32 %v2969, %v3180
      %v3182 = vpop.f32.mrf.mxu0
      %3183 = vdwg.mxu0
      %3184 = vst [vmem:[%s194] sm:$0xff] %v3058
      %3185 = vst [vmem:[%s194 + $0x8] sm:$0xff] %v3061
      %3186 = vst [vmem:[%s194 + $0x10] sm:$0xff] %v3066
      %3187 = vst [vmem:[%s194 + $0x18] sm:$0xff] %v3069
      %3188 = vst [vmem:[%s194 + $0x20] sm:$0xff] %v3074
      %3189 = vst [vmem:[%s194 + $0x28] sm:$0xff] %v3077
      %3190 = vst [vmem:[%s194 + $0x30] sm:$0xff] %v3082
      %3191 = vst [vmem:[%s194 + $0x38] sm:$0xff] %v3085
      %3192 = vst [vmem:[%s194 + $0x40] sm:$0xff] %v3090
      %3193 = vst [vmem:[%s194 + $0x48] sm:$0xff] %v3093
      %3194 = vst [vmem:[%s194 + $0x50] sm:$0xff] %v3098
      %3195 = vst [vmem:[%s194 + $0x58] sm:$0xff] %v3101
      %3196 = vst [vmem:[%s194 + $0x60] sm:$0xff] %v3106
      %3197 = vst [vmem:[%s194 + $0x68] sm:$0xff] %v3109
      %3198 = vst [vmem:[%s194 + $0x70] sm:$0xff] %v3114
      %3199 = vst [vmem:[%s194 + $0x78] sm:$0xff] %v3117
      %3200 = vst [vmem:[%s194 + $0x80] sm:$0xff] %v3122
      %3201 = vst [vmem:[%s194 + $0x88] sm:$0xff] %v3125
      %3202 = vst [vmem:[%s194 + $0x90] sm:$0xff] %v3130
      %3203 = vst [vmem:[%s194 + $0x98] sm:$0xff] %v3133
      %3204 = vst [vmem:[%s194 + $0xa0] sm:$0xff] %v3138
      %3205 = vst [vmem:[%s194 + $0xa8] sm:$0xff] %v3141
      %3206 = vst [vmem:[%s194 + $0xb0] sm:$0xff] %v3146
      %3207 = vst [vmem:[%s194 + $0xb8] sm:$0xff] %v3149
      %3208 = vst [vmem:[%s194 + $0xc0] sm:$0xff] %v3154
      %3209 = vst [vmem:[%s194 + $0xc8] sm:$0xff] %v3157
      %3210 = vst [vmem:[%s194 + $0xd0] sm:$0xff] %v3162
      %3211 = vst [vmem:[%s194 + $0xd8] sm:$0xff] %v3165
      %3212 = vst [vmem:[%s194 + $0xe0] sm:$0xff] %v3170
      %3213 = vst [vmem:[%s194 + $0xe8] sm:$0xff] %v3173
      %3214 = vst [vmem:[%s194 + $0xf0] sm:$0xff] %v3178
      %3215 = vst [vmem:[%s194 + $0xf8] sm:$0xff] %v3181
      %s3216 = smul.u32 16, %s19
      %p3217 = scmp.lt.s32.totalorder %s18, 1
      %s3218 = scalar_select %p3217, %s18, 1
      %p3219 = scmp.lt.s32.totalorder %s3216, 15
      %s3220 = scalar_select %p3219, %s3216, 15
      %s3221 = smul.addr %s3220, 2
      %s3222 = smul.addr %s3218, 32
      %s3223 = sadd.s32 %s3221, %s3222
      %s3224 = smul.addr %s3223, 8
      %s3225 = scalar_lea.vmem %s3, %s3224
      // Predicated region
      $region33: #{prunable_conv2d_forward.1} parent=31 // pred_check
        %p3226 = pneg %p114
      $region34: #{prunable_conv2d_forward.1} parent=31 // pred_check_branch
        %3228 = sbr.rel (%p3226) target = $region36
      $region35: #{prunable_conv2d_forward.1} parent=31 // pred_region
        %s3229 = smul.u32 16, %s19
      $region36: #{prunable_conv2d_forward.1} parent=31 // pred_fallthru
        _
    $region32: #{prunable_conv2d_forward.1} parent=5 // pred_fallthru
      _
    %p3230 = scmp.le.s32.totalorder 2, %s9
    // Predicated region
    $region37: #{prunable_conv2d_forward.1} parent=5 // pred_check
      %p3231 = pneg %p3230
    $region38: #{prunable_conv2d_forward.1} parent=5 // pred_check_branch
      %3233 = sbr.rel (%p3231) target = $region40
    $region39: #{prunable_conv2d_forward.1} parent=5 // pred_region
      %s3234 = ssub.s32 %s9, 2
      // Predicated region
      $region41: #{prunable_conv2d_forward.1} parent=39 // pred_check
        %p3235 = pneg %p120
      $region42: #{prunable_conv2d_forward.1} parent=39 // pred_check_branch
        %3237 = sbr.rel (%p3235) target = $region44
      $region43: #{prunable_conv2d_forward.1} parent=39 // pred_region
        %s3238 = smul.u32 16, %s21
        %p3239 = scmp.lt.s32.totalorder %s20, 1
        %s3240 = scalar_select %p3239, %s20, 1
        %p3241 = scmp.lt.s32.totalorder %s3238, 15
        %s3242 = scalar_select %p3241, %s3238, 15
        %s3243 = smul.addr %s3242, 2
        %s3244 = smul.addr %s3240, 32
        %s3245 = sadd.s32 %s3243, %s3244
        %s3246 = smul.addr %s3245, 8
        %s3247 = scalar_lea.vmem %s3, %s3246
      $region44: #{prunable_conv2d_forward.1} parent=39 // pred_fallthru
        _
    $region40: #{prunable_conv2d_forward.1} parent=5 // pred_fallthru
      _
  $region6: #{prunable_conv2d_forward.1} parent=0 // loop_footer
    %s13 = sadd.s32 1, %s9
  $region7: #{prunable_conv2d_forward.1} parent=0 // loop_footer_branch
    %8 = sbr.rel target = $region3
  $region8: #{prunable_conv2d_forward.1} parent=0 // loop_exit
    _

</llo_original>
